<compile_context>
chip_gen: v7x
topology: tpu7x:2x2x1
jax: 0.10.0
libtpu: 0.0.40
codegen_flags: <defaults>
</compile_context>

<pallas_src>
import jax
import jax.numpy as jnp
from jax import lax
from jax.experimental import pallas as pl
from jax.experimental.pallas import tpu as pltpu


def _largest_divisor_leq(n, cap):
    t = min(n, cap)
    while n % t:
        t -= 1
    return t


def cbow_forward(indices, emb, weight_t, bias, *, tile_v=512, tile_b=None,
                 vocab_core_split=2):
    """CBOW forward pass.

    indices : (B, C) int32 token ids.
    emb     : (V, D) f32   nn.Embedding.weight.
    weight_t: (D, V) bf16  nn.Linear.weight transposed once at init (MXU dtype).
    bias    : (V,)   f32   nn.Linear.bias.
    Returns (B, V) f32 logits.
    """
    B, C = indices.shape
    V, D = emb.shape
    assert weight_t.shape == (D, V) and bias.shape == (V,)

    tile_v = min(tile_v, V)
    assert V % tile_v == 0 and tile_v % 128 == 0, "vocab tile must be lane-dense"
    if tile_b is None:
        tile_b = _largest_divisor_leq(B, 256)
    assert B % tile_b == 0

    nb = B // tile_b
    nv = V // tile_v
    nsplit = vocab_core_split if (nv % vocab_core_split == 0) else 1
    nv_inner = nv // nsplit

    idx_flat = indices.reshape(-1).astype(jnp.int32)     # 1-D SMEM prefetch
    bias2 = bias.reshape(1, V)

    def kernel(idx_ref, emb_hbm, w_ref, b_ref, out_ref, emb_vmem, embeds_ref):
        i = pl.program_id(0)          # batch-tile index
        j = pl.program_id(2)          # inner vocab-tile index ("arbitrary")

        # Load the table and gather+sum the C context rows once per
        # (batch-tile, core-split); the bf16 embeds scratch is then reused for
        # every vocab tile of this batch tile.
        @pl.when(j == 0)
        def _load_and_gather():
            # Single-buffered VMEM residency: one blocking HBM->VMEM copy.
            pltpu.sync_copy(emb_hbm, emb_vmem)

            def gather_row(b, carry):
                base = (i * tile_b + b) * C
                tok0 = jnp.clip(idx_ref[base], 0, V - 1)
                acc = emb_vmem[pl.ds(tok0, 1), :]                  # (1, D) f32
                for c in range(1, C):                              # C is tiny/static
                    tok = jnp.clip(idx_ref[base + c], 0, V - 1)
                    acc = acc + emb_vmem[pl.ds(tok, 1), :]
                # single cast f32 -> bf16 at store time
                embeds_ref[pl.ds(b, 1), :] = acc.astype(embeds_ref.dtype)
                return carry

            lax.fori_loop(0, tile_b, gather_row, 0, unroll=min(tile_b, 8))

        # logits = embeds @ weight_t + bias : canonical (M,K)x(K,N) on the MXU,
        # bf16 operands, f32 accumulation.
        logits = jnp.dot(embeds_ref[...], w_ref[...],
                         preferred_element_type=jnp.float32)       # (TB, TILE_V)
        out_ref[...] = logits + b_ref[...]

    grid_spec = pltpu.PrefetchScalarGridSpec(
        num_scalar_prefetch=1,            # flat indices -> SMEM
        grid=(nb, nsplit, nv_inner),
        in_specs=[
            # Embedding table stays in HBM; copied manually (single-buffered).
            pl.BlockSpec(memory_space=pl.ANY),
            # Pre-transposed linear weight (D, V), vocab-tiled.
            pl.BlockSpec((D, tile_v), lambda i, o, j, idx: (0, o * nv_inner + j)),
            # Bias, vocab-tiled.
            pl.BlockSpec((1, tile_v), lambda i, o, j, idx: (0, o * nv_inner + j)),
        ],
        out_specs=pl.BlockSpec((tile_b, tile_v),
                               lambda i, o, j, idx: (i, o * nv_inner + j)),
        scratch_shapes=[
            pltpu.VMEM((V, D), emb.dtype),          # resident table (1 copy)
            pltpu.VMEM((tile_b, D), jnp.bfloat16),  # per-batch-tile embeds
        ],
    )

    cost = pl.CostEstimate(
        flops=2 * B * D * V + B * C * D,
        transcendentals=0,
        bytes_accessed=(nb * nsplit * V * D * emb.dtype.itemsize     # table loads
                        + nb * V * D * weight_t.dtype.itemsize       # weight stream
                        + nb * V * bias.dtype.itemsize               # bias stream
                        + B * V * 4                                  # logits write
                        + B * C * 4),                                # indices
    )

    return pl.pallas_call(
        kernel,
        out_shape=jax.ShapeDtypeStruct((B, V), jnp.float32),
        grid_spec=grid_spec,
        compiler_params=pltpu.CompilerParams(
            dimension_semantics=("parallel", "parallel", "arbitrary"),
            vmem_limit_bytes=32 * 1024 * 1024,
        ),
        cost_estimate=cost,
    )(idx_flat, emb, weight_t, bias2)


if __name__ == "__main__":
    # Small, MXU/lane-friendly sizes: vocab=2048, dims=128, batch=8, context=4.
    V, D = 2048, 128
    B, C = 8, 4

    key = jax.random.PRNGKey(0)
    k_emb, k_w, k_b, k_idx = jax.random.split(key, 4)

    # Deterministic params (shapes match nn.Embedding / nn.Linear).
    emb = jax.random.normal(k_emb, (V, D), dtype=jnp.float32)             # Embedding.weight
    bound = float(D) ** -0.5
    weight = jax.random.uniform(k_w, (V, D), jnp.float32, -bound, bound)  # Linear.weight (out, in)
    bias = jax.random.uniform(k_b, (V,), jnp.float32, -bound, bound)      # Linear.bias

    indices = jax.random.randint(k_idx, (B, C), 0, V, dtype=jnp.int32)

    # One-time host-side prep: cast to bf16 and transpose to (D, V) so the
    # kernel contraction is canonical (no per-tile XLU transpose).
    weight_t = weight.astype(jnp.bfloat16).T

    out = cbow_forward(indices, emb, weight_t, bias, tile_v=512)
    out = jax.block_until_ready(out)

    # Pure-JAX reference with identical numerics (bf16 matmul inputs, f32 accum).
    embeds_ref = jnp.take(emb, indices, axis=0).sum(axis=1)               # (B, D) f32
    ref = jnp.dot(embeds_ref.astype(jnp.bfloat16), weight_t,
                  preferred_element_type=jnp.float32) + bias

    assert out.shape == (B, V)
    assert jnp.allclose(out, ref, atol=2e-2, rtol=2e-2), \
        float(jnp.max(jnp.abs(out - ref)))

    print("KERNEL_OK")
</pallas_src>

<mosaic_0001>
module attributes {stable_mosaic.version = 11 : i64} {
  func.func @kernel(%arg0: i32, %arg1: i32, %arg2: i32, %arg3: memref<32xi32, #tpu.memory_space<smem>>, %arg4: memref<2048x128xf32, #tpu.memory_space<any>>, %arg5: memref<128x512xbf16, #tpu.memory_space<vmem>>, %arg6: memref<1x512xf32, #tpu.memory_space<vmem>>, %arg7: memref<8x512xf32, #tpu.memory_space<vmem>>, %arg8: memref<2048x128xf32, #tpu.memory_space<vmem>>, %arg9: memref<8x128xbf16, #tpu.memory_space<vmem>>) attributes {dimension_semantics = [#tpu.dimension_semantics<parallel>, #tpu.dimension_semantics<parallel>, #tpu.dimension_semantics<arbitrary>], iteration_bounds = array<i64: 1, 2, 2>, scalar_prefetch = 1 : i64, scratch_operands = 2 : i64, tpu.core_type = #tpu.core_type<tc>, window_params = [{}, {transform_indices = @transform_1, window_bounds = array<i64: 128, 512>}, {transform_indices = @transform_2, window_bounds = array<i64: 1, 512>}, {transform_indices = @transform_3, window_bounds = array<i64: 8, 512>}]} {
    %c0_i32 = arith.constant 0 : i32
    %0 = arith.cmpi eq, %arg2, %c0_i32 : i32
    %1 = arith.extui %0 : i1 to i32
    %c0_i32_0 = arith.constant 0 : i32
    %2 = arith.cmpi ne, %1, %c0_i32_0 : i32
    scf.if %2 {
      "tpu.region"() ({
        %298 = tpu.sem_alloc : memref<!tpu.dma_semaphore, #tpu.memory_space<semaphore_mem>>
        tpu.enqueue_dma source(%arg4 : memref<2048x128xf32, #tpu.memory_space<any>>) target(%arg8 : memref<2048x128xf32, #tpu.memory_space<vmem>>) target_semaphore(%298 : memref<!tpu.dma_semaphore, #tpu.memory_space<semaphore_mem>>)
        tpu.wait_dma2 semaphore(%298 : memref<!tpu.dma_semaphore, #tpu.memory_space<semaphore_mem>>) src(%arg4 : memref<2048x128xf32, #tpu.memory_space<any>>) dst(%arg8 : memref<2048x128xf32, #tpu.memory_space<vmem>>)
        tpu.yield
      }) : () -> ()
      %c0_i32_8 = arith.constant 0 : i32
      %c8_i32 = arith.constant 8 : i32
      %10 = arith.muli %arg0, %c8_i32 : i32
      %11 = arith.addi %10, %c0_i32_8 : i32
      %c4_i32 = arith.constant 4 : i32
      %12 = arith.muli %11, %c4_i32 : i32
      %13 = arith.index_cast %12 : i32 to index
      %14 = memref.load %arg3[%13] : memref<32xi32, #tpu.memory_space<smem>>
      %c0_i32_9 = arith.constant 0 : i32
      %c2047_i32 = arith.constant 2047 : i32
      %15 = arith.maxsi %c0_i32_9, %14 : i32
      %16 = arith.minsi %c2047_i32, %15 : i32
      %17 = arith.index_cast %16 : i32 to index
      %c0_10 = arith.constant 0 : index
      %18 = vector.load %arg8[%17, %c0_10] : memref<2048x128xf32, #tpu.memory_space<vmem>>, vector<1x128xf32>
      %c1_i32 = arith.constant 1 : i32
      %19 = arith.addi %12, %c1_i32 : i32
      %20 = arith.index_cast %19 : i32 to index
      %21 = memref.load %arg3[%20] : memref<32xi32, #tpu.memory_space<smem>>
      %c0_i32_11 = arith.constant 0 : i32
      %c2047_i32_12 = arith.constant 2047 : i32
      %22 = arith.maxsi %c0_i32_11, %21 : i32
      %23 = arith.minsi %c2047_i32_12, %22 : i32
      %24 = arith.index_cast %23 : i32 to index
      %c0_13 = arith.constant 0 : index
      %25 = vector.load %arg8[%24, %c0_13] : memref<2048x128xf32, #tpu.memory_space<vmem>>, vector<1x128xf32>
      %26 = arith.addf %18, %25 : vector<1x128xf32>
      %c2_i32 = arith.constant 2 : i32
      %27 = arith.addi %12, %c2_i32 : i32
      %28 = arith.index_cast %27 : i32 to index
      %29 = memref.load %arg3[%28] : memref<32xi32, #tpu.memory_space<smem>>
      %c0_i32_14 = arith.constant 0 : i32
      %c2047_i32_15 = arith.constant 2047 : i32
      %30 = arith.maxsi %c0_i32_14, %29 : i32
      %31 = arith.minsi %c2047_i32_15, %30 : i32
      %32 = arith.index_cast %31 : i32 to index
      %c0_16 = arith.constant 0 : index
      %33 = vector.load %arg8[%32, %c0_16] : memref<2048x128xf32, #tpu.memory_space<vmem>>, vector<1x128xf32>
      %34 = arith.addf %26, %33 : vector<1x128xf32>
      %c3_i32 = arith.constant 3 : i32
      %35 = arith.addi %12, %c3_i32 : i32
      %36 = arith.index_cast %35 : i32 to index
      %37 = memref.load %arg3[%36] : memref<32xi32, #tpu.memory_space<smem>>
      %c0_i32_17 = arith.constant 0 : i32
      %c2047_i32_18 = arith.constant 2047 : i32
      %38 = arith.maxsi %c0_i32_17, %37 : i32
      %39 = arith.minsi %c2047_i32_18, %38 : i32
      %40 = arith.index_cast %39 : i32 to index
      %c0_19 = arith.constant 0 : index
      %41 = vector.load %arg8[%40, %c0_19] : memref<2048x128xf32, #tpu.memory_space<vmem>>, vector<1x128xf32>
      %42 = arith.addf %34, %41 : vector<1x128xf32>
      %43 = arith.truncf %42 : vector<1x128xf32> to vector<1x128xbf16>
      %44 = arith.index_cast %c0_i32_8 : i32 to index
      %c0_20 = arith.constant 0 : index
      %45 = vector.load %arg9[%44, %c0_20] : memref<8x128xbf16, #tpu.memory_space<vmem>>, vector<1x128xbf16>
      tpu.vector_store %arg9[%44, %c0_20], %43 {strides = array<i32>} : memref<8x128xbf16, #tpu.memory_space<vmem>>, vector<1x128xbf16>,
      %c1_i32_21 = arith.constant 1 : i32
      %c8_i32_22 = arith.constant 8 : i32
      %46 = arith.muli %arg0, %c8_i32_22 : i32
      %47 = arith.addi %46, %c1_i32_21 : i32
      %c4_i32_23 = arith.constant 4 : i32
      %48 = arith.muli %47, %c4_i32_23 : i32
      %49 = arith.index_cast %48 : i32 to index
      %50 = memref.load %arg3[%49] : memref<32xi32, #tpu.memory_space<smem>>
      %c0_i32_24 = arith.constant 0 : i32
      %c2047_i32_25 = arith.constant 2047 : i32
      %51 = arith.maxsi %c0_i32_24, %50 : i32
      %52 = arith.minsi %c2047_i32_25, %51 : i32
      %53 = arith.index_cast %52 : i32 to index
      %c0_26 = arith.constant 0 : index
      %54 = vector.load %arg8[%53, %c0_26] : memref<2048x128xf32, #tpu.memory_space<vmem>>, vector<1x128xf32>
      %c1_i32_27 = arith.constant 1 : i32
      %55 = arith.addi %48, %c1_i32_27 : i32
      %56 = arith.index_cast %55 : i32 to index
      %57 = memref.load %arg3[%56] : memref<32xi32, #tpu.memory_space<smem>>
      %c0_i32_28 = arith.constant 0 : i32
      %c2047_i32_29 = arith.constant 2047 : i32
      %58 = arith.maxsi %c0_i32_28, %57 : i32
      %59 = arith.minsi %c2047_i32_29, %58 : i32
      %60 = arith.index_cast %59 : i32 to index
      %c0_30 = arith.constant 0 : index
      %61 = vector.load %arg8[%60, %c0_30] : memref<2048x128xf32, #tpu.memory_space<vmem>>, vector<1x128xf32>
      %62 = arith.addf %54, %61 : vector<1x128xf32>
      %c2_i32_31 = arith.constant 2 : i32
      %63 = arith.addi %48, %c2_i32_31 : i32
      %64 = arith.index_cast %63 : i32 to index
      %65 = memref.load %arg3[%64] : memref<32xi32, #tpu.memory_space<smem>>
      %c0_i32_32 = arith.constant 0 : i32
      %c2047_i32_33 = arith.constant 2047 : i32
      %66 = arith.maxsi %c0_i32_32, %65 : i32
      %67 = arith.minsi %c2047_i32_33, %66 : i32
      %68 = arith.index_cast %67 : i32 to index
      %c0_34 = arith.constant 0 : index
      %69 = vector.load %arg8[%68, %c0_34] : memref<2048x128xf32, #tpu.memory_space<vmem>>, vector<1x128xf32>
      %70 = arith.addf %62, %69 : vector<1x128xf32>
      %c3_i32_35 = arith.constant 3 : i32
      %71 = arith.addi %48, %c3_i32_35 : i32
      %72 = arith.index_cast %71 : i32 to index
      %73 = memref.load %arg3[%72] : memref<32xi32, #tpu.memory_space<smem>>
      %c0_i32_36 = arith.constant 0 : i32
      %c2047_i32_37 = arith.constant 2047 : i32
      %74 = arith.maxsi %c0_i32_36, %73 : i32
      %75 = arith.minsi %c2047_i32_37, %74 : i32
      %76 = arith.index_cast %75 : i32 to index
      %c0_38 = arith.constant 0 : index
      %77 = vector.load %arg8[%76, %c0_38] : memref<2048x128xf32, #tpu.memory_space<vmem>>, vector<1x128xf32>
      %78 = arith.addf %70, %77 : vector<1x128xf32>
      %79 = arith.truncf %78 : vector<1x128xf32> to vector<1x128xbf16>
      %80 = arith.index_cast %c1_i32_21 : i32 to index
      %c0_39 = arith.constant 0 : index
      %81 = vector.load %arg9[%80, %c0_39] : memref<8x128xbf16, #tpu.memory_space<vmem>>, vector<1x128xbf16>
      tpu.vector_store %arg9[%80, %c0_39], %79 {strides = array<i32>} : memref<8x128xbf16, #tpu.memory_space<vmem>>, vector<1x128xbf16>,
      %c2_i32_40 = arith.constant 2 : i32
      %c8_i32_41 = arith.constant 8 : i32
      %82 = arith.muli %arg0, %c8_i32_41 : i32
      %83 = arith.addi %82, %c2_i32_40 : i32
      %c4_i32_42 = arith.constant 4 : i32
      %84 = arith.muli %83, %c4_i32_42 : i32
      %85 = arith.index_cast %84 : i32 to index
      %86 = memref.load %arg3[%85] : memref<32xi32, #tpu.memory_space<smem>>
      %c0_i32_43 = arith.constant 0 : i32
      %c2047_i32_44 = arith.constant 2047 : i32
      %87 = arith.maxsi %c0_i32_43, %86 : i32
      %88 = arith.minsi %c2047_i32_44, %87 : i32
      %89 = arith.index_cast %88 : i32 to index
      %c0_45 = arith.constant 0 : index
      %90 = vector.load %arg8[%89, %c0_45] : memref<2048x128xf32, #tpu.memory_space<vmem>>, vector<1x128xf32>
      %c1_i32_46 = arith.constant 1 : i32
      %91 = arith.addi %84, %c1_i32_46 : i32
      %92 = arith.index_cast %91 : i32 to index
      %93 = memref.load %arg3[%92] : memref<32xi32, #tpu.memory_space<smem>>
      %c0_i32_47 = arith.constant 0 : i32
      %c2047_i32_48 = arith.constant 2047 : i32
      %94 = arith.maxsi %c0_i32_47, %93 : i32
      %95 = arith.minsi %c2047_i32_48, %94 : i32
      %96 = arith.index_cast %95 : i32 to index
      %c0_49 = arith.constant 0 : index
      %97 = vector.load %arg8[%96, %c0_49] : memref<2048x128xf32, #tpu.memory_space<vmem>>, vector<1x128xf32>
      %98 = arith.addf %90, %97 : vector<1x128xf32>
      %c2_i32_50 = arith.constant 2 : i32
      %99 = arith.addi %84, %c2_i32_50 : i32
      %100 = arith.index_cast %99 : i32 to index
      %101 = memref.load %arg3[%100] : memref<32xi32, #tpu.memory_space<smem>>
      %c0_i32_51 = arith.constant 0 : i32
      %c2047_i32_52 = arith.constant 2047 : i32
      %102 = arith.maxsi %c0_i32_51, %101 : i32
      %103 = arith.minsi %c2047_i32_52, %102 : i32
      %104 = arith.index_cast %103 : i32 to index
      %c0_53 = arith.constant 0 : index
      %105 = vector.load %arg8[%104, %c0_53] : memref<2048x128xf32, #tpu.memory_space<vmem>>, vector<1x128xf32>
      %106 = arith.addf %98, %105 : vector<1x128xf32>
      %c3_i32_54 = arith.constant 3 : i32
      %107 = arith.addi %84, %c3_i32_54 : i32
      %108 = arith.index_cast %107 : i32 to index
      %109 = memref.load %arg3[%108] : memref<32xi32, #tpu.memory_space<smem>>
      %c0_i32_55 = arith.constant 0 : i32
      %c2047_i32_56 = arith.constant 2047 : i32
      %110 = arith.maxsi %c0_i32_55, %109 : i32
      %111 = arith.minsi %c2047_i32_56, %110 : i32
      %112 = arith.index_cast %111 : i32 to index
      %c0_57 = arith.constant 0 : index
      %113 = vector.load %arg8[%112, %c0_57] : memref<2048x128xf32, #tpu.memory_space<vmem>>, vector<1x128xf32>
      %114 = arith.addf %106, %113 : vector<1x128xf32>
      %115 = arith.truncf %114 : vector<1x128xf32> to vector<1x128xbf16>
      %116 = arith.index_cast %c2_i32_40 : i32 to index
      %c0_58 = arith.constant 0 : index
      %117 = vector.load %arg9[%116, %c0_58] : memref<8x128xbf16, #tpu.memory_space<vmem>>, vector<1x128xbf16>
      tpu.vector_store %arg9[%116, %c0_58], %115 {strides = array<i32>} : memref<8x128xbf16, #tpu.memory_space<vmem>>, vector<1x128xbf16>,
      %c3_i32_59 = arith.constant 3 : i32
      %c8_i32_60 = arith.constant 8 : i32
      %118 = arith.muli %arg0, %c8_i32_60 : i32
      %119 = arith.addi %118, %c3_i32_59 : i32
      %c4_i32_61 = arith.constant 4 : i32
      %120 = arith.muli %119, %c4_i32_61 : i32
      %121 = arith.index_cast %120 : i32 to index
      %122 = memref.load %arg3[%121] : memref<32xi32, #tpu.memory_space<smem>>
      %c0_i32_62 = arith.constant 0 : i32
      %c2047_i32_63 = arith.constant 2047 : i32
      %123 = arith.maxsi %c0_i32_62, %122 : i32
      %124 = arith.minsi %c2047_i32_63, %123 : i32
      %125 = arith.index_cast %124 : i32 to index
      %c0_64 = arith.constant 0 : index
      %126 = vector.load %arg8[%125, %c0_64] : memref<2048x128xf32, #tpu.memory_space<vmem>>, vector<1x128xf32>
      %c1_i32_65 = arith.constant 1 : i32
      %127 = arith.addi %120, %c1_i32_65 : i32
      %128 = arith.index_cast %127 : i32 to index
      %129 = memref.load %arg3[%128] : memref<32xi32, #tpu.memory_space<smem>>
      %c0_i32_66 = arith.constant 0 : i32
      %c2047_i32_67 = arith.constant 2047 : i32
      %130 = arith.maxsi %c0_i32_66, %129 : i32
      %131 = arith.minsi %c2047_i32_67, %130 : i32
      %132 = arith.index_cast %131 : i32 to index
      %c0_68 = arith.constant 0 : index
      %133 = vector.load %arg8[%132, %c0_68] : memref<2048x128xf32, #tpu.memory_space<vmem>>, vector<1x128xf32>
      %134 = arith.addf %126, %133 : vector<1x128xf32>
      %c2_i32_69 = arith.constant 2 : i32
      %135 = arith.addi %120, %c2_i32_69 : i32
      %136 = arith.index_cast %135 : i32 to index
      %137 = memref.load %arg3[%136] : memref<32xi32, #tpu.memory_space<smem>>
      %c0_i32_70 = arith.constant 0 : i32
      %c2047_i32_71 = arith.constant 2047 : i32
      %138 = arith.maxsi %c0_i32_70, %137 : i32
      %139 = arith.minsi %c2047_i32_71, %138 : i32
      %140 = arith.index_cast %139 : i32 to index
      %c0_72 = arith.constant 0 : index
      %141 = vector.load %arg8[%140, %c0_72] : memref<2048x128xf32, #tpu.memory_space<vmem>>, vector<1x128xf32>
      %142 = arith.addf %134, %141 : vector<1x128xf32>
      %c3_i32_73 = arith.constant 3 : i32
      %143 = arith.addi %120, %c3_i32_73 : i32
      %144 = arith.index_cast %143 : i32 to index
      %145 = memref.load %arg3[%144] : memref<32xi32, #tpu.memory_space<smem>>
      %c0_i32_74 = arith.constant 0 : i32
      %c2047_i32_75 = arith.constant 2047 : i32
      %146 = arith.maxsi %c0_i32_74, %145 : i32
      %147 = arith.minsi %c2047_i32_75, %146 : i32
      %148 = arith.index_cast %147 : i32 to index
      %c0_76 = arith.constant 0 : index
      %149 = vector.load %arg8[%148, %c0_76] : memref<2048x128xf32, #tpu.memory_space<vmem>>, vector<1x128xf32>
      %150 = arith.addf %142, %149 : vector<1x128xf32>
      %151 = arith.truncf %150 : vector<1x128xf32> to vector<1x128xbf16>
      %152 = arith.index_cast %c3_i32_59 : i32 to index
      %c0_77 = arith.constant 0 : index
      %153 = vector.load %arg9[%152, %c0_77] : memref<8x128xbf16, #tpu.memory_space<vmem>>, vector<1x128xbf16>
      tpu.vector_store %arg9[%152, %c0_77], %151 {strides = array<i32>} : memref<8x128xbf16, #tpu.memory_space<vmem>>, vector<1x128xbf16>,
      %c4_i32_78 = arith.constant 4 : i32
      %c8_i32_79 = arith.constant 8 : i32
      %154 = arith.muli %arg0, %c8_i32_79 : i32
      %155 = arith.addi %154, %c4_i32_78 : i32
      %c4_i32_80 = arith.constant 4 : i32
      %156 = arith.muli %155, %c4_i32_80 : i32
      %157 = arith.index_cast %156 : i32 to index
      %158 = memref.load %arg3[%157] : memref<32xi32, #tpu.memory_space<smem>>
      %c0_i32_81 = arith.constant 0 : i32
      %c2047_i32_82 = arith.constant 2047 : i32
      %159 = arith.maxsi %c0_i32_81, %158 : i32
      %160 = arith.minsi %c2047_i32_82, %159 : i32
      %161 = arith.index_cast %160 : i32 to index
      %c0_83 = arith.constant 0 : index
      %162 = vector.load %arg8[%161, %c0_83] : memref<2048x128xf32, #tpu.memory_space<vmem>>, vector<1x128xf32>
      %c1_i32_84 = arith.constant 1 : i32
      %163 = arith.addi %156, %c1_i32_84 : i32
      %164 = arith.index_cast %163 : i32 to index
      %165 = memref.load %arg3[%164] : memref<32xi32, #tpu.memory_space<smem>>
      %c0_i32_85 = arith.constant 0 : i32
      %c2047_i32_86 = arith.constant 2047 : i32
      %166 = arith.maxsi %c0_i32_85, %165 : i32
      %167 = arith.minsi %c2047_i32_86, %166 : i32
      %168 = arith.index_cast %167 : i32 to index
      %c0_87 = arith.constant 0 : index
      %169 = vector.load %arg8[%168, %c0_87] : memref<2048x128xf32, #tpu.memory_space<vmem>>, vector<1x128xf32>
      %170 = arith.addf %162, %169 : vector<1x128xf32>
      %c2_i32_88 = arith.constant 2 : i32
      %171 = arith.addi %156, %c2_i32_88 : i32
      %172 = arith.index_cast %171 : i32 to index
      %173 = memref.load %arg3[%172] : memref<32xi32, #tpu.memory_space<smem>>
      %c0_i32_89 = arith.constant 0 : i32
      %c2047_i32_90 = arith.constant 2047 : i32
      %174 = arith.maxsi %c0_i32_89, %173 : i32
      %175 = arith.minsi %c2047_i32_90, %174 : i32
      %176 = arith.index_cast %175 : i32 to index
      %c0_91 = arith.constant 0 : index
      %177 = vector.load %arg8[%176, %c0_91] : memref<2048x128xf32, #tpu.memory_space<vmem>>, vector<1x128xf32>
      %178 = arith.addf %170, %177 : vector<1x128xf32>
      %c3_i32_92 = arith.constant 3 : i32
      %179 = arith.addi %156, %c3_i32_92 : i32
      %180 = arith.index_cast %179 : i32 to index
      %181 = memref.load %arg3[%180] : memref<32xi32, #tpu.memory_space<smem>>
      %c0_i32_93 = arith.constant 0 : i32
      %c2047_i32_94 = arith.constant 2047 : i32
      %182 = arith.maxsi %c0_i32_93, %181 : i32
      %183 = arith.minsi %c2047_i32_94, %182 : i32
      %184 = arith.index_cast %183 : i32 to index
      %c0_95 = arith.constant 0 : index
      %185 = vector.load %arg8[%184, %c0_95] : memref<2048x128xf32, #tpu.memory_space<vmem>>, vector<1x128xf32>
      %186 = arith.addf %178, %185 : vector<1x128xf32>
      %187 = arith.truncf %186 : vector<1x128xf32> to vector<1x128xbf16>
      %188 = arith.index_cast %c4_i32_78 : i32 to index
      %c0_96 = arith.constant 0 : index
      %189 = vector.load %arg9[%188, %c0_96] : memref<8x128xbf16, #tpu.memory_space<vmem>>, vector<1x128xbf16>
      tpu.vector_store %arg9[%188, %c0_96], %187 {strides = array<i32>} : memref<8x128xbf16, #tpu.memory_space<vmem>>, vector<1x128xbf16>,
      %c5_i32 = arith.constant 5 : i32
      %c8_i32_97 = arith.constant 8 : i32
      %190 = arith.muli %arg0, %c8_i32_97 : i32
      %191 = arith.addi %190, %c5_i32 : i32
      %c4_i32_98 = arith.constant 4 : i32
      %192 = arith.muli %191, %c4_i32_98 : i32
      %193 = arith.index_cast %192 : i32 to index
      %194 = memref.load %arg3[%193] : memref<32xi32, #tpu.memory_space<smem>>
      %c0_i32_99 = arith.constant 0 : i32
      %c2047_i32_100 = arith.constant 2047 : i32
      %195 = arith.maxsi %c0_i32_99, %194 : i32
      %196 = arith.minsi %c2047_i32_100, %195 : i32
      %197 = arith.index_cast %196 : i32 to index
      %c0_101 = arith.constant 0 : index
      %198 = vector.load %arg8[%197, %c0_101] : memref<2048x128xf32, #tpu.memory_space<vmem>>, vector<1x128xf32>
      %c1_i32_102 = arith.constant 1 : i32
      %199 = arith.addi %192, %c1_i32_102 : i32
      %200 = arith.index_cast %199 : i32 to index
      %201 = memref.load %arg3[%200] : memref<32xi32, #tpu.memory_space<smem>>
      %c0_i32_103 = arith.constant 0 : i32
      %c2047_i32_104 = arith.constant 2047 : i32
      %202 = arith.maxsi %c0_i32_103, %201 : i32
      %203 = arith.minsi %c2047_i32_104, %202 : i32
      %204 = arith.index_cast %203 : i32 to index
      %c0_105 = arith.constant 0 : index
      %205 = vector.load %arg8[%204, %c0_105] : memref<2048x128xf32, #tpu.memory_space<vmem>>, vector<1x128xf32>
      %206 = arith.addf %198, %205 : vector<1x128xf32>
      %c2_i32_106 = arith.constant 2 : i32
      %207 = arith.addi %192, %c2_i32_106 : i32
      %208 = arith.index_cast %207 : i32 to index
      %209 = memref.load %arg3[%208] : memref<32xi32, #tpu.memory_space<smem>>
      %c0_i32_107 = arith.constant 0 : i32
      %c2047_i32_108 = arith.constant 2047 : i32
      %210 = arith.maxsi %c0_i32_107, %209 : i32
      %211 = arith.minsi %c2047_i32_108, %210 : i32
      %212 = arith.index_cast %211 : i32 to index
      %c0_109 = arith.constant 0 : index
      %213 = vector.load %arg8[%212, %c0_109] : memref<2048x128xf32, #tpu.memory_space<vmem>>, vector<1x128xf32>
      %214 = arith.addf %206, %213 : vector<1x128xf32>
      %c3_i32_110 = arith.constant 3 : i32
      %215 = arith.addi %192, %c3_i32_110 : i32
      %216 = arith.index_cast %215 : i32 to index
      %217 = memref.load %arg3[%216] : memref<32xi32, #tpu.memory_space<smem>>
      %c0_i32_111 = arith.constant 0 : i32
      %c2047_i32_112 = arith.constant 2047 : i32
      %218 = arith.maxsi %c0_i32_111, %217 : i32
      %219 = arith.minsi %c2047_i32_112, %218 : i32
      %220 = arith.index_cast %219 : i32 to index
      %c0_113 = arith.constant 0 : index
      %221 = vector.load %arg8[%220, %c0_113] : memref<2048x128xf32, #tpu.memory_space<vmem>>, vector<1x128xf32>
      %222 = arith.addf %214, %221 : vector<1x128xf32>
      %223 = arith.truncf %222 : vector<1x128xf32> to vector<1x128xbf16>
      %224 = arith.index_cast %c5_i32 : i32 to index
      %c0_114 = arith.constant 0 : index
      %225 = vector.load %arg9[%224, %c0_114] : memref<8x128xbf16, #tpu.memory_space<vmem>>, vector<1x128xbf16>
      tpu.vector_store %arg9[%224, %c0_114], %223 {strides = array<i32>} : memref<8x128xbf16, #tpu.memory_space<vmem>>, vector<1x128xbf16>,
      %c6_i32 = arith.constant 6 : i32
      %c8_i32_115 = arith.constant 8 : i32
      %226 = arith.muli %arg0, %c8_i32_115 : i32
      %227 = arith.addi %226, %c6_i32 : i32
      %c4_i32_116 = arith.constant 4 : i32
      %228 = arith.muli %227, %c4_i32_116 : i32
      %229 = arith.index_cast %228 : i32 to index
      %230 = memref.load %arg3[%229] : memref<32xi32, #tpu.memory_space<smem>>
      %c0_i32_117 = arith.constant 0 : i32
      %c2047_i32_118 = arith.constant 2047 : i32
      %231 = arith.maxsi %c0_i32_117, %230 : i32
      %232 = arith.minsi %c2047_i32_118, %231 : i32
      %233 = arith.index_cast %232 : i32 to index
      %c0_119 = arith.constant 0 : index
      %234 = vector.load %arg8[%233, %c0_119] : memref<2048x128xf32, #tpu.memory_space<vmem>>, vector<1x128xf32>
      %c1_i32_120 = arith.constant 1 : i32
      %235 = arith.addi %228, %c1_i32_120 : i32
      %236 = arith.index_cast %235 : i32 to index
      %237 = memref.load %arg3[%236] : memref<32xi32, #tpu.memory_space<smem>>
      %c0_i32_121 = arith.constant 0 : i32
      %c2047_i32_122 = arith.constant 2047 : i32
      %238 = arith.maxsi %c0_i32_121, %237 : i32
      %239 = arith.minsi %c2047_i32_122, %238 : i32
      %240 = arith.index_cast %239 : i32 to index
      %c0_123 = arith.constant 0 : index
      %241 = vector.load %arg8[%240, %c0_123] : memref<2048x128xf32, #tpu.memory_space<vmem>>, vector<1x128xf32>
      %242 = arith.addf %234, %241 : vector<1x128xf32>
      %c2_i32_124 = arith.constant 2 : i32
      %243 = arith.addi %228, %c2_i32_124 : i32
      %244 = arith.index_cast %243 : i32 to index
      %245 = memref.load %arg3[%244] : memref<32xi32, #tpu.memory_space<smem>>
      %c0_i32_125 = arith.constant 0 : i32
      %c2047_i32_126 = arith.constant 2047 : i32
      %246 = arith.maxsi %c0_i32_125, %245 : i32
      %247 = arith.minsi %c2047_i32_126, %246 : i32
      %248 = arith.index_cast %247 : i32 to index
      %c0_127 = arith.constant 0 : index
      %249 = vector.load %arg8[%248, %c0_127] : memref<2048x128xf32, #tpu.memory_space<vmem>>, vector<1x128xf32>
      %250 = arith.addf %242, %249 : vector<1x128xf32>
      %c3_i32_128 = arith.constant 3 : i32
      %251 = arith.addi %228, %c3_i32_128 : i32
      %252 = arith.index_cast %251 : i32 to index
      %253 = memref.load %arg3[%252] : memref<32xi32, #tpu.memory_space<smem>>
      %c0_i32_129 = arith.constant 0 : i32
      %c2047_i32_130 = arith.constant 2047 : i32
      %254 = arith.maxsi %c0_i32_129, %253 : i32
      %255 = arith.minsi %c2047_i32_130, %254 : i32
      %256 = arith.index_cast %255 : i32 to index
      %c0_131 = arith.constant 0 : index
      %257 = vector.load %arg8[%256, %c0_131] : memref<2048x128xf32, #tpu.memory_space<vmem>>, vector<1x128xf32>
      %258 = arith.addf %250, %257 : vector<1x128xf32>
      %259 = arith.truncf %258 : vector<1x128xf32> to vector<1x128xbf16>
      %260 = arith.index_cast %c6_i32 : i32 to index
      %c0_132 = arith.constant 0 : index
      %261 = vector.load %arg9[%260, %c0_132] : memref<8x128xbf16, #tpu.memory_space<vmem>>, vector<1x128xbf16>
      tpu.vector_store %arg9[%260, %c0_132], %259 {strides = array<i32>} : memref<8x128xbf16, #tpu.memory_space<vmem>>, vector<1x128xbf16>,
      %c7_i32 = arith.constant 7 : i32
      %c8_i32_133 = arith.constant 8 : i32
      %262 = arith.muli %arg0, %c8_i32_133 : i32
      %263 = arith.addi %262, %c7_i32 : i32
      %c4_i32_134 = arith.constant 4 : i32
      %264 = arith.muli %263, %c4_i32_134 : i32
      %265 = arith.index_cast %264 : i32 to index
      %266 = memref.load %arg3[%265] : memref<32xi32, #tpu.memory_space<smem>>
      %c0_i32_135 = arith.constant 0 : i32
      %c2047_i32_136 = arith.constant 2047 : i32
      %267 = arith.maxsi %c0_i32_135, %266 : i32
      %268 = arith.minsi %c2047_i32_136, %267 : i32
      %269 = arith.index_cast %268 : i32 to index
      %c0_137 = arith.constant 0 : index
      %270 = vector.load %arg8[%269, %c0_137] : memref<2048x128xf32, #tpu.memory_space<vmem>>, vector<1x128xf32>
      %c1_i32_138 = arith.constant 1 : i32
      %271 = arith.addi %264, %c1_i32_138 : i32
      %272 = arith.index_cast %271 : i32 to index
      %273 = memref.load %arg3[%272] : memref<32xi32, #tpu.memory_space<smem>>
      %c0_i32_139 = arith.constant 0 : i32
      %c2047_i32_140 = arith.constant 2047 : i32
      %274 = arith.maxsi %c0_i32_139, %273 : i32
      %275 = arith.minsi %c2047_i32_140, %274 : i32
      %276 = arith.index_cast %275 : i32 to index
      %c0_141 = arith.constant 0 : index
      %277 = vector.load %arg8[%276, %c0_141] : memref<2048x128xf32, #tpu.memory_space<vmem>>, vector<1x128xf32>
      %278 = arith.addf %270, %277 : vector<1x128xf32>
      %c2_i32_142 = arith.constant 2 : i32
      %279 = arith.addi %264, %c2_i32_142 : i32
      %280 = arith.index_cast %279 : i32 to index
      %281 = memref.load %arg3[%280] : memref<32xi32, #tpu.memory_space<smem>>
      %c0_i32_143 = arith.constant 0 : i32
      %c2047_i32_144 = arith.constant 2047 : i32
      %282 = arith.maxsi %c0_i32_143, %281 : i32
      %283 = arith.minsi %c2047_i32_144, %282 : i32
      %284 = arith.index_cast %283 : i32 to index
      %c0_145 = arith.constant 0 : index
      %285 = vector.load %arg8[%284, %c0_145] : memref<2048x128xf32, #tpu.memory_space<vmem>>, vector<1x128xf32>
      %286 = arith.addf %278, %285 : vector<1x128xf32>
      %c3_i32_146 = arith.constant 3 : i32
      %287 = arith.addi %264, %c3_i32_146 : i32
      %288 = arith.index_cast %287 : i32 to index
      %289 = memref.load %arg3[%288] : memref<32xi32, #tpu.memory_space<smem>>
      %c0_i32_147 = arith.constant 0 : i32
      %c2047_i32_148 = arith.constant 2047 : i32
      %290 = arith.maxsi %c0_i32_147, %289 : i32
      %291 = arith.minsi %c2047_i32_148, %290 : i32
      %292 = arith.index_cast %291 : i32 to index
      %c0_149 = arith.constant 0 : index
      %293 = vector.load %arg8[%292, %c0_149] : memref<2048x128xf32, #tpu.memory_space<vmem>>, vector<1x128xf32>
      %294 = arith.addf %286, %293 : vector<1x128xf32>
      %295 = arith.truncf %294 : vector<1x128xf32> to vector<1x128xbf16>
      %296 = arith.index_cast %c7_i32 : i32 to index
      %c0_150 = arith.constant 0 : index
      %297 = vector.load %arg9[%296, %c0_150] : memref<8x128xbf16, #tpu.memory_space<vmem>>, vector<1x128xbf16>
      tpu.vector_store %arg9[%296, %c0_150], %295 {strides = array<i32>} : memref<8x128xbf16, #tpu.memory_space<vmem>>, vector<1x128xbf16>,
      %c8_i32_151 = arith.constant 8 : i32
    } else {
    }
    %c0 = arith.constant 0 : index
    %c0_1 = arith.constant 0 : index
    %3 = vector.load %arg9[%c0, %c0_1] : memref<8x128xbf16, #tpu.memory_space<vmem>>, vector<8x128xbf16>
    %c0_2 = arith.constant 0 : index
    %c0_3 = arith.constant 0 : index
    %4 = vector.load %arg5[%c0_2, %c0_3] : memref<128x512xbf16, #tpu.memory_space<vmem>>, vector<128x512xbf16>
    %cst = arith.constant dense<0.000000e+00> : vector<8x512xf32>
    %5 = tpu.matmul %3, %4, %cst {dimension_numbers = #tpu.dot_dimension_numbers<[1], [0], [0], [1], [0, 0, 1, 1], [], []>} : vector<8x128xbf16>, vector<128x512xbf16>, vector<8x512xf32> -> vector<8x512xf32>
    %c0_4 = arith.constant 0 : index
    %c0_5 = arith.constant 0 : index
    %6 = vector.load %arg6[%c0_4, %c0_5] : memref<1x512xf32, #tpu.memory_space<vmem>>, vector<1x512xf32>
    %7 = vector.broadcast %6 : vector<1x512xf32> to vector<8x512xf32>
    %8 = arith.addf %5, %7 : vector<8x512xf32>
    %c0_6 = arith.constant 0 : index
    %c0_7 = arith.constant 0 : index
    %9 = vector.load %arg7[%c0_6, %c0_7] : memref<8x512xf32, #tpu.memory_space<vmem>>, vector<8x512xf32>
    tpu.vector_store %arg7[%c0_6, %c0_7], %8 {strides = array<i32>} : memref<8x512xf32, #tpu.memory_space<vmem>>, vector<8x512xf32>,
    return
  }
  func.func @transform_1(%arg0: i32, %arg1: i32, %arg2: i32, %arg3: memref<32xi32, #tpu.memory_space<smem>>) -> (i32, i32) {
    %c2_i32 = arith.constant 2 : i32
    %0 = arith.muli %arg1, %c2_i32 : i32
    %1 = arith.addi %0, %arg2 : i32
    %c0_i32 = arith.constant 0 : i32
    %c0_i32_0 = arith.constant 0 : i32
    return %c0_i32, %1 : i32, i32
  }
  func.func @transform_2(%arg0: i32, %arg1: i32, %arg2: i32, %arg3: memref<32xi32, #tpu.memory_space<smem>>) -> (i32, i32) {
    %c2_i32 = arith.constant 2 : i32
    %0 = arith.muli %arg1, %c2_i32 : i32
    %1 = arith.addi %0, %arg2 : i32
    %c0_i32 = arith.constant 0 : i32
    %c0_i32_0 = arith.constant 0 : i32
    return %c0_i32, %1 : i32, i32
  }
  func.func @transform_3(%arg0: i32, %arg1: i32, %arg2: i32, %arg3: memref<32xi32, #tpu.memory_space<smem>>) -> (i32, i32) {
    %c2_i32 = arith.constant 2 : i32
    %0 = arith.muli %arg1, %c2_i32 : i32
    %1 = arith.addi %0, %arg2 : i32
    %c0_i32 = arith.constant 0 : i32
    return %arg0, %1 : i32, i32
  }
}

</mosaic_0001>

<llo_original>
// kernel: tpu_custom_call.1
$region0: #{tpu_custom_call.1}
  #allocation0 [shape = 'u32[]', space=smem, size = 0x4, offset = 0x4, fixed_abs, tag = 'smem constant byte address 0x4 - core index']
  #allocation1 [shape = 'u32[144,128]{1,0:T(1,128)}', space=vmem, size = 0x12000, scoped, tag = 'internal scratch']
  #allocation2 [shape = 'f32[2048,128]{1,0:T(8,128)}', space=vmem, size = 0x100000, scoped, tag = 'scratch operand']
  #allocation3 [shape = 'bf16[8,128]{1,0:T(8,128)(2,1)}', space=vmem, size = 0x800, scoped, tag = 'scratch operand']
  #allocation4 [shape = 's32[1]{0}', space=sflag, size = 0x4, scoped, tag = 'scoped memory for tpu_custom_call.1']
  #allocation5 [shape = 'u8[512]{0}', space=smem, size = 0x200, scoped, tag = 'prefetched SMEM operand 0']
  #allocation13 [shape = 's32[]', space=sflag, size = 0x4, offset = 0, fixed_abs, tag = 'sflag constant byte address 0x0 - dummy sync flag']
  #allocation14 [shape = 's32[]', space=sflag, size = 0x4, offset = 0, fixed_abs, tag = 'sflag constant byte address 0x0 - dummy sync flag']
  #allocation15 [shape = 'u32[]', space=smem, size = 0x4, offset = 0x44, fixed_abs, tag = 'smem constant byte address 0x44 - assertion arg 0']
  #allocation16 [shape = 'u32[]', space=smem, size = 0x4, offset = 0x48, fixed_abs, tag = 'smem constant byte address 0x48 - assertion arg 1']
  %s0 = inlined_call_operand.hbm [shape: s32[32], index: 0, kind: input, shape index: {}]
  %s1 = inlined_call_operand.hbm [shape: f32[2048,128], index: 1, kind: input, shape index: {}]
  %s2 = inlined_call_operand.hbm [shape: bf16[128,2048], index: 2, kind: input, shape index: {}]
  %s3 = inlined_call_operand.hbm [shape: f32[1,2048], index: 3, kind: input, shape index: {}]
  %s4 = inlined_call_operand.hbm [shape: f32[8,2048], index: 4, kind: output, shape index: {}]
  %s5 = sld [smem:[#allocation0]]
  $region58: #{tpu_custom_call.1} parent=0
    _
  %s7 = ssub.s32 1, %s5
  %s8 = scalar_select 0, %s7, %s5
  %10 = dma.hbm_to_smem %s0, 16, [#allocation5], [#allocation4]
  %11 = dma.done [#allocation4], 16
  %12 = sfence
  $region1: #{tpu_custom_call.1} parent=0
    #allocation6 [shape = 'u8[262144]{0}', space=vmem, size = 0x40000, scoped, tag = 'input window, operand 2']
    #allocation7 [shape = 's32[2]{0}', space=sflag, size = 0x8, scoped, tag = 'scoped memory for tpu_custom_call.1']
    #allocation8 [shape = 's32[2]{0}', space=sflag, size = 0x8, scoped, tag = 'scoped memory for tpu_custom_call.1']
    #allocation9 [shape = 'u8[4096]{0}', space=vmem, size = 0x1000, scoped, tag = 'input window, operand 3']
    #allocation10 [shape = 's32[2]{0}', space=sflag, size = 0x8, scoped, tag = 'scoped memory for tpu_custom_call.1']
    #allocation11 [shape = 'u8[32768]{0}', space=vmem, size = 0x8000, scoped, tag = 'output window, operand 0']
    %13 = vsyncpa [#allocation7], 0
    %s14 = scalar_lea.sflag [#allocation7], 1
    %15 = vsyncpa %s14, 0
    %16 = vsyncpa [#allocation10], 0
    %s17 = scalar_lea.sflag [#allocation10], 1
    %18 = vsyncpa %s17, 0
    %19 = vsyncpa [#allocation8], 0
    %s20 = scalar_lea.sflag [#allocation8], 1
    %21 = vsyncpa %s20, 0
    loop: start=0, step=1, limit=6
    $region2: #{tpu_custom_call.1} parent=1 // loop_pre_header
      _
    $region3: #{tpu_custom_call.1} parent=1 // loop_header
      %s23 = sphi 0, %s27
      %p24 = scmp.ge.s32.totalorder %s23, 6
      %s30 = sphi 0, %s49
      %s31 = sphi 0, %s45
      %s32 = sphi 0, %s41
      %s33 = sphi 0, %s30
      %s34 = sphi 0, %s31
      %s35 = sphi 0, %s32
      %s36 = sphi 0, %s33
      %s37 = sphi 0, %s34
      %s38 = sphi 0, %s35
      %s56 = sphi 0, %s58
      %s59 = sphi 0, %s56
      %s60 = sphi 0, %s59
      %s76 = sphi 0, %s60
      %s86 = sphi 0, %s88
      %s89 = sphi 0, %s86
      %s90 = sphi 0, %s89
      %s106 = sphi 0, %s90
      %s118 = sphi 0, %s120
      %s121 = sphi 0, %s118
      %s122 = sphi 0, %s121
      %s138 = sphi 0, %s122
    $region4: #{tpu_custom_call.1} parent=1 // loop_header_branch
      %26 = sbr.rel (%p24) target = $region8
    $region5: #{tpu_custom_call.1} parent=1 // loop_body
      %s28 = ssub.s32 %s23, 1
      %s29 = ssub.s32 %s23, 2
      %s39 = sadd.s32 1, %s32
      %p40 = scmp.ge.s32.totalorder %s39, 2
      %s41 = scalar_select %p40, 0, %s39
      %s42 = sadd.s32 1, %s31
      %s43 = scalar_select %p40, %s42, %s31
      %p44 = scmp.ge.s32.totalorder %s43, 2
      %s45 = scalar_select %p44, 0, %s43
      %s46 = sadd.s32 1, %s30
      %s47 = scalar_select %p44, %s46, %s30
      %p48 = scmp.ge.s32.totalorder %s47, 1
      %s49 = scalar_select %p48, 0, %s47
      %s50 = smul.u32 %s31, 2
      %s51 = sadd.s32 %s50, %s32
      %s52 = smul.u32 %s45, 2
      %s53 = sadd.s32 %s52, %s41
      %s54 = ssub.s32 %s51, %s53
      %p55 = scmp.eq.s32.totalorder %s54, 0
      %s57 = sadd.s32 %s56, 1
      %s58 = scalar_select %p55, %s56, %s57
      %p61 = pneg %p55
      %p62 = scmp.eq.s32.totalorder %s23, 3
      %p63 = por %p61, %p62
      %p64 = scmp.ne.s32.totalorder %s56, %s59
      %p65 = scmp.eq.s32.totalorder %s23, 0
      %p66 = por %p64, %p65
      %p67 = scmp.ne.s32.totalorder %s56, %s59
      %p68 = scmp.eq.s32.totalorder %s28, 3
      %p69 = por %p67, %p68
      %p70 = scmp.ne.s32.totalorder %s59, %s60
      %p71 = scmp.eq.s32.totalorder %s28, 0
      %p72 = por %p70, %p71
      %p73 = scmp.ne.s32.totalorder %s59, %s60
      %p74 = scmp.eq.s32.totalorder %s29, 3
      %p75 = por %p73, %p74
      %p77 = scmp.ne.s32.totalorder %s60, %s76
      %p78 = scmp.eq.s32.totalorder %s29, 0
      %p79 = por %p77, %p78
      %s80 = smul.u32 %s31, 2
      %s81 = sadd.s32 %s80, %s32
      %s82 = smul.u32 %s45, 2
      %s83 = sadd.s32 %s82, %s41
      %s84 = ssub.s32 %s81, %s83
      %p85 = scmp.eq.s32.totalorder %s84, 0
      %s87 = sadd.s32 %s86, 1
      %s88 = scalar_select %p85, %s86, %s87
      %p91 = pneg %p85
      %p92 = scmp.eq.s32.totalorder %s23, 3
      %p93 = por %p91, %p92
      %p94 = scmp.ne.s32.totalorder %s86, %s89
      %p95 = scmp.eq.s32.totalorder %s23, 0
      %p96 = por %p94, %p95
      %p97 = scmp.ne.s32.totalorder %s86, %s89
      %p98 = scmp.eq.s32.totalorder %s28, 3
      %p99 = por %p97, %p98
      %p100 = scmp.ne.s32.totalorder %s89, %s90
      %p101 = scmp.eq.s32.totalorder %s28, 0
      %p102 = por %p100, %p101
      %p103 = scmp.ne.s32.totalorder %s89, %s90
      %p104 = scmp.eq.s32.totalorder %s29, 3
      %p105 = por %p103, %p104
      %p107 = scmp.ne.s32.totalorder %s90, %s106
      %p108 = scmp.eq.s32.totalorder %s29, 0
      %p109 = por %p107, %p108
      %s110 = smul.u32 %s31, 2
      %s111 = sadd.s32 %s110, %s32
      %s112 = smul.u32 %s45, 2
      %s113 = sadd.s32 %s112, %s41
      %s114 = ssub.s32 %s30, %s49
      %s115 = ssub.s32 %s111, %s113
      %s116 = sor.u32 %s114, %s115
      %p117 = scmp.eq.s32.totalorder %s116, 0
      %s119 = sadd.s32 %s118, 1
      %s120 = scalar_select %p117, %s118, %s119
      %p123 = pneg %p117
      %p124 = scmp.eq.s32.totalorder %s23, 3
      %p125 = por %p123, %p124
      %p126 = scmp.ne.s32.totalorder %s118, %s121
      %p127 = scmp.eq.s32.totalorder %s23, 0
      %p128 = por %p126, %p127
      %p129 = scmp.ne.s32.totalorder %s118, %s121
      %p130 = scmp.eq.s32.totalorder %s28, 3
      %p131 = por %p129, %p130
      %p132 = scmp.ne.s32.totalorder %s121, %s122
      %p133 = scmp.eq.s32.totalorder %s28, 0
      %p134 = por %p132, %p133
      %p135 = scmp.ne.s32.totalorder %s121, %s122
      %p136 = scmp.eq.s32.totalorder %s29, 3
      %p137 = por %p135, %p136
      %p139 = scmp.ne.s32.totalorder %s122, %s138
      %p140 = scmp.eq.s32.totalorder %s29, 0
      %p141 = por %p139, %p140
      %p142 = scmp.le.s32.totalorder 1, %s23
      %p143 = scmp.lt.s32.totalorder %s23, 5
      %p144 = pnand %p142, %p143
      %p145 = pneg %p144
      // Predicated region
      $region9: #{tpu_custom_call.1} parent=5 // pred_check
        _
      $region10: #{tpu_custom_call.1} parent=5 // pred_check_branch
        %147 = sbr.rel (%p144) target = $region12
      $region11: #{tpu_custom_call.1} parent=5 // pred_region
        %s148 = ssub.s32 %s23, 1
      $region12: #{tpu_custom_call.1} parent=5 // pred_fallthru
        _
      %p149 = scmp.lt.s32.totalorder %s23, 4
      // Predicated region
      $region13: #{tpu_custom_call.1} parent=5 // pred_check
        %p150 = pneg %p149
      $region14: #{tpu_custom_call.1} parent=5 // pred_check_branch
        %152 = sbr.rel (%p150) target = $region16
      $region15: #{tpu_custom_call.1} parent=5 // pred_region
        // Predicated region
        $region17: #{tpu_custom_call.1} parent=15 // pred_check
          %p153 = pneg %p66
        $region18: #{tpu_custom_call.1} parent=15 // pred_check_branch
          %155 = sbr.rel (%p153) target = $region20
        $region19: #{tpu_custom_call.1} parent=15 // pred_region
          %s156 = sand.u32 %s56, 1
          %s157 = scalar_lea.sflag [#allocation7], %s156
          %s158 = sand.u32 %s56, 1
          %s159 = smul.addr %s158, 256
          %s160 = scalar_lea.vmem [#allocation6], %s159
          %s161 = smul.u32 %s31, 2
          %s162 = sadd.s32 %s161, %s32
          %s163 = smul.u32 4, %s162
          %s165 = ssub.s32 4096, 4096
          %166 = vsyncadd %s157, %s165
          %s167 = smul.addr %s163, 64
          %s168 = scalar_lea.hbm %s2, %s167
          %s169 = sshll.u32 %s160, 4
          %s170 = int_to_ptr.vmem [resolvable:$true] %s169
          %175 = dma.hbm_to_vmem [thread:$0]  %s168, 4096, %s170, %s157, 1024, 256, 16
        $region20: #{tpu_custom_call.1} parent=15 // pred_fallthru
          _
        // Predicated region
        $region21: #{tpu_custom_call.1} parent=15 // pred_check
          %p176 = pneg %p96
        $region22: #{tpu_custom_call.1} parent=15 // pred_check_branch
          %178 = sbr.rel (%p176) target = $region24
        $region23: #{tpu_custom_call.1} parent=15 // pred_region
          %s179 = sand.u32 %s86, 1
          %s180 = scalar_lea.sflag [#allocation10], %s179
          %s181 = sand.u32 %s86, 1
          %s182 = smul.addr %s181, 4
          %s183 = scalar_lea.vmem [#allocation9], %s182
          %s184 = smul.u32 %s31, 2
          %s185 = sadd.s32 %s184, %s32
          %s186 = smul.u32 4, %s185
          %s188 = ssub.s32 64, 64
          %189 = vsyncadd %s180, %s188
          %s190 = smul.addr %s186, 16
          %s191 = scalar_lea.hbm %s3, %s190
          %s193 = sshll.u32 %s183, 4
          %s194 = int_to_ptr.vmem [resolvable:$true] %s193
          %196 = dma.hbm_to_vmem [thread:$0]  %s191, 64, %s194, %s180
        $region24: #{tpu_custom_call.1} parent=15 // pred_fallthru
          _
      $region16: #{tpu_custom_call.1} parent=5 // pred_fallthru
        _
      %p197 = scmp.le.s32.totalorder 1, %s23
      %p198 = scmp.lt.s32.totalorder %s23, 5
      %p199 = pnand %p197, %p198
      %p200 = pneg %p199
      // Predicated region
      $region25: #{tpu_custom_call.1} parent=5 // pred_check
        _
      $region26: #{tpu_custom_call.1} parent=5 // pred_check_branch
        %202 = sbr.rel (%p199) target = $region28
      $region27: #{tpu_custom_call.1} parent=5 // pred_region
        %s203 = ssub.s32 %s23, 1
        %s204 = sand.u32 %s59, 1
        %s205 = scalar_lea.sflag [#allocation7], %s204
        %s206 = sand.u32 %s59, 1
        %s207 = smul.addr %s206, 256
        %s208 = scalar_lea.vmem [#allocation6], %s207
        // Predicated region
        $region29: #{tpu_custom_call.1} parent=27 // pred_check
          %p209 = pneg %p72
        $region30: #{tpu_custom_call.1} parent=27 // pred_check_branch
          %211 = sbr.rel (%p209) target = $region32
        $region31: #{tpu_custom_call.1} parent=27 // pred_region
          %212 = dma.done %s205, 4096
        $region32: #{tpu_custom_call.1} parent=27 // pred_fallthru
          _
        %s213 = sand.u32 %s89, 1
        %s214 = scalar_lea.sflag [#allocation10], %s213
        %s215 = sand.u32 %s89, 1
        %s216 = smul.addr %s215, 4
        %s217 = scalar_lea.vmem [#allocation9], %s216
        // Predicated region
        $region33: #{tpu_custom_call.1} parent=27 // pred_check
          %p218 = pneg %p102
        $region34: #{tpu_custom_call.1} parent=27 // pred_check_branch
          %220 = sbr.rel (%p218) target = $region36
        $region35: #{tpu_custom_call.1} parent=27 // pred_region
          %221 = dma.done %s214, 64
        $region36: #{tpu_custom_call.1} parent=27 // pred_fallthru
          _
        %s222 = sand.u32 %s59, 1
        %s223 = scalar_lea.sflag [#allocation7], %s222
        %s224 = sand.u32 %s59, 1
        %s225 = smul.addr %s224, 256
        %s226 = scalar_lea.vmem [#allocation6], %s225
        %p227 = pneg %p72
        %p228 = pneg %p69
        %s229 = sand.u32 %s89, 1
        %s230 = scalar_lea.sflag [#allocation10], %s229
        %s231 = sand.u32 %s89, 1
        %s232 = smul.addr %s231, 4
        %s233 = scalar_lea.vmem [#allocation9], %s232
        %p234 = pneg %p102
        %p235 = pneg %p99
        %p236 = pneg %p134
        %p237 = pneg %p131
        %s238 = sand.u32 %s121, 1
        %s239 = scalar_lea.sflag [#allocation8], %s238
        %s240 = sand.u32 %s121, 1
        %s241 = smul.addr %s240, 32
        %s242 = scalar_lea.vmem [#allocation11], %s241
        %s243 = smul.u32 %s34, 2
        %s244 = sadd.s32 %s243, %s35
        %s245 = smul.u32 4, %s244
        %s246 = smul.u32 %s34, 2
        %s247 = sadd.s32 %s246, %s35
        %s248 = smul.u32 4, %s247
        %s249 = smul.u32 %s34, 2
        %s250 = sadd.s32 %s249, %s35
        %s251 = smul.u32 4, %s250
        %p253 = scmp.eq.s32.totalorder %s35, 0
        // Predicated region
        $region37: #{tpu_custom_call.1} parent=27 // pred_check
          %p254 = pneg %p253
        $region38: #{tpu_custom_call.1} parent=27 // pred_check_branch
          %256 = sbr.rel (%p254) target = $region40
        $region39: #{tpu_custom_call.1} parent=27 // pred_region
          $region41: #{tpu_custom_call.1} parent=39
            #allocation12 [shape = 's32[1]{0}', space=sflag, size = 0x4, scoped, tag = 'scoped memory for tpu_custom_call.1']
            // Predicated region
            $region42: #{tpu_custom_call.1} parent=41 // pred_check
              _
            $region43: #{tpu_custom_call.1} parent=41 // pred_check_branch
              %258 = sbr.rel target = $region45
            $region44: #{tpu_custom_call.1} parent=41 // pred_region
              %259 = sst [smem:[#allocation15]] [#allocation14]
              %260 = sst [smem:[#allocation16]] [#allocation13]
            $region45: #{tpu_custom_call.1} parent=41 // pred_fallthru
              _
            %262 = shalt.err (0)
            %s264 = sshll.u32 [#allocation2], 4
            %s265 = int_to_ptr.vmem [resolvable:$true] %s264
            %267 = dma.hbm_to_vmem [thread:$0]  %s1, 32768, %s265, [#allocation12]
            %s268 = smul.u32 2048, 1
            %s269 = sshll.u32 %s268, 4
            %270 = dma.done [#allocation12], %s269
          %s271 = smul.u32 %s33, 32
          %s272 = sld [smem:[#allocation5 + %s271]]
          %p273 = scmp.gt.s32.totalorder %s272, 0
          %s274 = scalar_select %p273, %s272, 0
          %p275 = scmp.lt.s32.totalorder %s274, 2047
          %s276 = scalar_select %p275, %s274, 2047
          %s277 = scalar_lea.vmem [#allocation2], %s276
          %v278 = vld [vmem:[%s277] sm:$0x1]
          %s279 = sadd.s32 %s271, 1
          %s280 = sld [smem:[#allocation5 + %s279]]
          %p281 = scmp.gt.s32.totalorder %s280, 0
          %s282 = scalar_select %p281, %s280, 0
          %p283 = scmp.lt.s32.totalorder %s282, 2047
          %s284 = scalar_select %p283, %s282, 2047
          %s285 = scalar_lea.vmem [#allocation2], %s284
          %v286 = vld [vmem:[%s285] sm:$0x1]
          %v287 = vadd.f32 %v278, %v286
          %s288 = sadd.s32 %s271, 2
          %s289 = sld [smem:[#allocation5 + %s288]]
          %p290 = scmp.gt.s32.totalorder %s289, 0
          %s291 = scalar_select %p290, %s289, 0
          %p292 = scmp.lt.s32.totalorder %s291, 2047
          %s293 = scalar_select %p292, %s291, 2047
          %s294 = scalar_lea.vmem [#allocation2], %s293
          %v295 = vld [vmem:[%s294] sm:$0x1]
          %v296 = vadd.f32 %v287, %v295
          %s297 = sadd.s32 %s271, 3
          %s298 = sld [smem:[#allocation5 + %s297]]
          %p299 = scmp.gt.s32.totalorder %s298, 0
          %s300 = scalar_select %p299, %s298, 0
          %p301 = scmp.lt.s32.totalorder %s300, 2047
          %s302 = scalar_select %p301, %s300, 2047
          %s303 = scalar_lea.vmem [#allocation2], %s302
          %v304 = vld [vmem:[%s303] sm:$0x1]
          %v305 = vadd.f32 %v296, %v304
          %v306 = vpack.c.bf16 %v305, %v305
          %vm307 = vcmask 1040384
          %vm308 = vsmask.f32 256
          %vm309 = vmand %vm307, %vm308
          %v310 = vld [vmem:[#allocation3] sm:$0x1]
          %v311 = vsel %vm309, %v306, %v310
          %312 = vst [vmem:[#allocation3] sm:$0x1] %v311
          %s313 = smul.u32 %s33, 8
          %s314 = sadd.s32 %s313, 1
          %s315 = smul.u32 %s314, 4
          %s316 = sld [smem:[#allocation5 + %s315]]
          %p317 = scmp.gt.s32.totalorder %s316, 0
          %s318 = scalar_select %p317, %s316, 0
          %p319 = scmp.lt.s32.totalorder %s318, 2047
          %s320 = scalar_select %p319, %s318, 2047
          %s321 = scalar_lea.vmem [#allocation2], %s320
          %v322 = vld [vmem:[%s321] sm:$0x1]
          %s323 = sadd.s32 %s315, 1
          %s324 = sld [smem:[#allocation5 + %s323]]
          %p325 = scmp.gt.s32.totalorder %s324, 0
          %s326 = scalar_select %p325, %s324, 0
          %p327 = scmp.lt.s32.totalorder %s326, 2047
          %s328 = scalar_select %p327, %s326, 2047
          %s329 = scalar_lea.vmem [#allocation2], %s328
          %v330 = vld [vmem:[%s329] sm:$0x1]
          %v331 = vadd.f32 %v322, %v330
          %s332 = sadd.s32 %s315, 2
          %s333 = sld [smem:[#allocation5 + %s332]]
          %p334 = scmp.gt.s32.totalorder %s333, 0
          %s335 = scalar_select %p334, %s333, 0
          %p336 = scmp.lt.s32.totalorder %s335, 2047
          %s337 = scalar_select %p336, %s335, 2047
          %s338 = scalar_lea.vmem [#allocation2], %s337
          %v339 = vld [vmem:[%s338] sm:$0x1]
          %v340 = vadd.f32 %v331, %v339
          %s341 = sadd.s32 %s315, 3
          %s342 = sld [smem:[#allocation5 + %s341]]
          %p343 = scmp.gt.s32.totalorder %s342, 0
          %s344 = scalar_select %p343, %s342, 0
          %p345 = scmp.lt.s32.totalorder %s344, 2047
          %s346 = scalar_select %p345, %s344, 2047
          %s347 = scalar_lea.vmem [#allocation2], %s346
          %v348 = vld [vmem:[%s347] sm:$0x1]
          %v349 = vadd.f32 %v340, %v348
          %v350 = vpack.c.bf16 %v349, %v349
          %v352 = vunpack.c.l.b16 %v350
          %v353 = vpack.c.b16 %v352, %v352
          %v355 = vshll.u32 %v353, 16
          %vm358 = vsmask.f32 7938
          %vm359 = vmand %vm307, %vm358
          %v360 = vld [vmem:[#allocation3] sm:$0x1]
          %v361 = vsel %vm359, %v355, %v360
          %362 = vst [vmem:[#allocation3] sm:$0x1] %v361
          %s363 = sadd.s32 %s313, 2
          %s364 = smul.u32 %s363, 4
          %s365 = sld [smem:[#allocation5 + %s364]]
          %p366 = scmp.gt.s32.totalorder %s365, 0
          %s367 = scalar_select %p366, %s365, 0
          %p368 = scmp.lt.s32.totalorder %s367, 2047
          %s369 = scalar_select %p368, %s367, 2047
          %s370 = scalar_lea.vmem [#allocation2], %s369
          %v371 = vld [vmem:[%s370] sm:$0x1]
          %s372 = sadd.s32 %s364, 1
          %s373 = sld [smem:[#allocation5 + %s372]]
          %p374 = scmp.gt.s32.totalorder %s373, 0
          %s375 = scalar_select %p374, %s373, 0
          %p376 = scmp.lt.s32.totalorder %s375, 2047
          %s377 = scalar_select %p376, %s375, 2047
          %s378 = scalar_lea.vmem [#allocation2], %s377
          %v379 = vld [vmem:[%s378] sm:$0x1]
          %v380 = vadd.f32 %v371, %v379
          %s381 = sadd.s32 %s364, 2
          %s382 = sld [smem:[#allocation5 + %s381]]
          %p383 = scmp.gt.s32.totalorder %s382, 0
          %s384 = scalar_select %p383, %s382, 0
          %p385 = scmp.lt.s32.totalorder %s384, 2047
          %s386 = scalar_select %p385, %s384, 2047
          %s387 = scalar_lea.vmem [#allocation2], %s386
          %v388 = vld [vmem:[%s387] sm:$0x1]
          %v389 = vadd.f32 %v380, %v388
          %s390 = sadd.s32 %s364, 3
          %s391 = sld [smem:[#allocation5 + %s390]]
          %p392 = scmp.gt.s32.totalorder %s391, 0
          %s393 = scalar_select %p392, %s391, 0
          %p394 = scmp.lt.s32.totalorder %s393, 2047
          %s395 = scalar_select %p394, %s393, 2047
          %s396 = scalar_lea.vmem [#allocation2], %s395
          %v397 = vld [vmem:[%s396] sm:$0x1]
          %v398 = vadd.f32 %v389, %v397
          %v399 = vpack.c.bf16 %v398, %v398
          %v401 = vunpack.c.l.b16 %v399
          %v402 = vpack.c.b16 %v401, %v401
          %v403 = vrot.slane %v402, 7
          %vm405 = vcmask 1041409
          %vm406 = vsmask.f32 1280
          %vm407 = vmand %vm405, %vm406
          %v408 = vld [vmem:[#allocation3] sm:$0x2]
          %v409 = vsel %vm407, %v403, %v408
          %410 = vst [vmem:[#allocation3] sm:$0x2] %v409
          %s411 = sadd.s32 %s313, 3
          %s412 = smul.u32 %s411, 4
          %s413 = sld [smem:[#allocation5 + %s412]]
          %p414 = scmp.gt.s32.totalorder %s413, 0
          %s415 = scalar_select %p414, %s413, 0
          %p416 = scmp.lt.s32.totalorder %s415, 2047
          %s417 = scalar_select %p416, %s415, 2047
          %s418 = scalar_lea.vmem [#allocation2], %s417
          %v419 = vld [vmem:[%s418] sm:$0x1]
          %s420 = sadd.s32 %s412, 1
          %s421 = sld [smem:[#allocation5 + %s420]]
          %p422 = scmp.gt.s32.totalorder %s421, 0
          %s423 = scalar_select %p422, %s421, 0
          %p424 = scmp.lt.s32.totalorder %s423, 2047
          %s425 = scalar_select %p424, %s423, 2047
          %s426 = scalar_lea.vmem [#allocation2], %s425
          %v427 = vld [vmem:[%s426] sm:$0x1]
          %v428 = vadd.f32 %v419, %v427
          %s429 = sadd.s32 %s412, 2
          %s430 = sld [smem:[#allocation5 + %s429]]
          %p431 = scmp.gt.s32.totalorder %s430, 0
          %s432 = scalar_select %p431, %s430, 0
          %p433 = scmp.lt.s32.totalorder %s432, 2047
          %s434 = scalar_select %p433, %s432, 2047
          %s435 = scalar_lea.vmem [#allocation2], %s434
          %v436 = vld [vmem:[%s435] sm:$0x1]
          %v437 = vadd.f32 %v428, %v436
          %s438 = sadd.s32 %s412, 3
          %s439 = sld [smem:[#allocation5 + %s438]]
          %p440 = scmp.gt.s32.totalorder %s439, 0
          %s441 = scalar_select %p440, %s439, 0
          %p442 = scmp.lt.s32.totalorder %s441, 2047
          %s443 = scalar_select %p442, %s441, 2047
          %s444 = scalar_lea.vmem [#allocation2], %s443
          %v445 = vld [vmem:[%s444] sm:$0x1]
          %v446 = vadd.f32 %v437, %v445
          %v447 = vpack.c.bf16 %v446, %v446
          %v449 = vunpack.c.l.b16 %v447
          %v450 = vpack.c.b16 %v449, %v449
          %v452 = vshll.u32 %v450, 16
          %v454 = vrot.slane %v452, 7
          %vm456 = vsmask.f32 7942
          %vm457 = vmand %vm405, %vm456
          %v458 = vld [vmem:[#allocation3] sm:$0x2]
          %v459 = vsel %vm457, %v454, %v458
          %460 = vst [vmem:[#allocation3] sm:$0x2] %v459
          %s461 = sadd.s32 %s313, 4
          %s462 = smul.u32 %s461, 4
          %s463 = sld [smem:[#allocation5 + %s462]]
          %p464 = scmp.gt.s32.totalorder %s463, 0
          %s465 = scalar_select %p464, %s463, 0
          %p466 = scmp.lt.s32.totalorder %s465, 2047
          %s467 = scalar_select %p466, %s465, 2047
          %s468 = scalar_lea.vmem [#allocation2], %s467
          %v469 = vld [vmem:[%s468] sm:$0x1]
          %s470 = sadd.s32 %s462, 1
          %s471 = sld [smem:[#allocation5 + %s470]]
          %p472 = scmp.gt.s32.totalorder %s471, 0
          %s473 = scalar_select %p472, %s471, 0
          %p474 = scmp.lt.s32.totalorder %s473, 2047
          %s475 = scalar_select %p474, %s473, 2047
          %s476 = scalar_lea.vmem [#allocation2], %s475
          %v477 = vld [vmem:[%s476] sm:$0x1]
          %v478 = vadd.f32 %v469, %v477
          %s479 = sadd.s32 %s462, 2
          %s480 = sld [smem:[#allocation5 + %s479]]
          %p481 = scmp.gt.s32.totalorder %s480, 0
          %s482 = scalar_select %p481, %s480, 0
          %p483 = scmp.lt.s32.totalorder %s482, 2047
          %s484 = scalar_select %p483, %s482, 2047
          %s485 = scalar_lea.vmem [#allocation2], %s484
          %v486 = vld [vmem:[%s485] sm:$0x1]
          %v487 = vadd.f32 %v478, %v486
          %s488 = sadd.s32 %s462, 3
          %s489 = sld [smem:[#allocation5 + %s488]]
          %p490 = scmp.gt.s32.totalorder %s489, 0
          %s491 = scalar_select %p490, %s489, 0
          %p492 = scmp.lt.s32.totalorder %s491, 2047
          %s493 = scalar_select %p492, %s491, 2047
          %s494 = scalar_lea.vmem [#allocation2], %s493
          %v495 = vld [vmem:[%s494] sm:$0x1]
          %v496 = vadd.f32 %v487, %v495
          %v497 = vpack.c.bf16 %v496, %v496
          %v499 = vunpack.c.l.b16 %v497
          %v500 = vpack.c.b16 %v499, %v499
          %v501 = vrot.slane %v500, 6
          %vm503 = vcmask 1042434
          %vm504 = vsmask.f32 2304
          %vm505 = vmand %vm503, %vm504
          %v506 = vld [vmem:[#allocation3] sm:$0x4]
          %v507 = vsel %vm505, %v501, %v506
          %508 = vst [vmem:[#allocation3] sm:$0x4] %v507
          %s509 = sadd.s32 %s313, 5
          %s510 = smul.u32 %s509, 4
          %s511 = sld [smem:[#allocation5 + %s510]]
          %p512 = scmp.gt.s32.totalorder %s511, 0
          %s513 = scalar_select %p512, %s511, 0
          %p514 = scmp.lt.s32.totalorder %s513, 2047
          %s515 = scalar_select %p514, %s513, 2047
          %s516 = scalar_lea.vmem [#allocation2], %s515
          %v517 = vld [vmem:[%s516] sm:$0x1]
          %s518 = sadd.s32 %s510, 1
          %s519 = sld [smem:[#allocation5 + %s518]]
          %p520 = scmp.gt.s32.totalorder %s519, 0
          %s521 = scalar_select %p520, %s519, 0
          %p522 = scmp.lt.s32.totalorder %s521, 2047
          %s523 = scalar_select %p522, %s521, 2047
          %s524 = scalar_lea.vmem [#allocation2], %s523
          %v525 = vld [vmem:[%s524] sm:$0x1]
          %v526 = vadd.f32 %v517, %v525
          %s527 = sadd.s32 %s510, 2
          %s528 = sld [smem:[#allocation5 + %s527]]
          %p529 = scmp.gt.s32.totalorder %s528, 0
          %s530 = scalar_select %p529, %s528, 0
          %p531 = scmp.lt.s32.totalorder %s530, 2047
          %s532 = scalar_select %p531, %s530, 2047
          %s533 = scalar_lea.vmem [#allocation2], %s532
          %v534 = vld [vmem:[%s533] sm:$0x1]
          %v535 = vadd.f32 %v526, %v534
          %s536 = sadd.s32 %s510, 3
          %s537 = sld [smem:[#allocation5 + %s536]]
          %p538 = scmp.gt.s32.totalorder %s537, 0
          %s539 = scalar_select %p538, %s537, 0
          %p540 = scmp.lt.s32.totalorder %s539, 2047
          %s541 = scalar_select %p540, %s539, 2047
          %s542 = scalar_lea.vmem [#allocation2], %s541
          %v543 = vld [vmem:[%s542] sm:$0x1]
          %v544 = vadd.f32 %v535, %v543
          %v545 = vpack.c.bf16 %v544, %v544
          %v547 = vunpack.c.l.b16 %v545
          %v548 = vpack.c.b16 %v547, %v547
          %v550 = vshll.u32 %v548, 16
          %v552 = vrot.slane %v550, 6
          %vm554 = vsmask.f32 7946
          %vm555 = vmand %vm503, %vm554
          %v556 = vld [vmem:[#allocation3] sm:$0x4]
          %v557 = vsel %vm555, %v552, %v556
          %558 = vst [vmem:[#allocation3] sm:$0x4] %v557
          %s559 = sadd.s32 %s313, 6
          %s560 = smul.u32 %s559, 4
          %s561 = sld [smem:[#allocation5 + %s560]]
          %p562 = scmp.gt.s32.totalorder %s561, 0
          %s563 = scalar_select %p562, %s561, 0
          %p564 = scmp.lt.s32.totalorder %s563, 2047
          %s565 = scalar_select %p564, %s563, 2047
          %s566 = scalar_lea.vmem [#allocation2], %s565
          %v567 = vld [vmem:[%s566] sm:$0x1]
          %s568 = sadd.s32 %s560, 1
          %s569 = sld [smem:[#allocation5 + %s568]]
          %p570 = scmp.gt.s32.totalorder %s569, 0
          %s571 = scalar_select %p570, %s569, 0
          %p572 = scmp.lt.s32.totalorder %s571, 2047
          %s573 = scalar_select %p572, %s571, 2047
          %s574 = scalar_lea.vmem [#allocation2], %s573
          %v575 = vld [vmem:[%s574] sm:$0x1]
          %v576 = vadd.f32 %v567, %v575
          %s577 = sadd.s32 %s560, 2
          %s578 = sld [smem:[#allocation5 + %s577]]
          %p579 = scmp.gt.s32.totalorder %s578, 0
          %s580 = scalar_select %p579, %s578, 0
          %p581 = scmp.lt.s32.totalorder %s580, 2047
          %s582 = scalar_select %p581, %s580, 2047
          %s583 = scalar_lea.vmem [#allocation2], %s582
          %v584 = vld [vmem:[%s583] sm:$0x1]
          %v585 = vadd.f32 %v576, %v584
          %s586 = sadd.s32 %s560, 3
          %s587 = sld [smem:[#allocation5 + %s586]]
          %p588 = scmp.gt.s32.totalorder %s587, 0
          %s589 = scalar_select %p588, %s587, 0
          %p590 = scmp.lt.s32.totalorder %s589, 2047
          %s591 = scalar_select %p590, %s589, 2047
          %s592 = scalar_lea.vmem [#allocation2], %s591
          %v593 = vld [vmem:[%s592] sm:$0x1]
          %v594 = vadd.f32 %v585, %v593
          %v595 = vpack.c.bf16 %v594, %v594
          %v597 = vunpack.c.l.b16 %v595
          %v598 = vpack.c.b16 %v597, %v597
          %v599 = vrot.slane %v598, 5
          %vm601 = vcmask 1043459
          %vm602 = vsmask.f32 3328
          %vm603 = vmand %vm601, %vm602
          %v604 = vld [vmem:[#allocation3] sm:$0x8]
          %v605 = vsel %vm603, %v599, %v604
          %606 = vst [vmem:[#allocation3] sm:$0x8] %v605
          %s607 = sadd.s32 %s313, 7
          %s608 = smul.u32 %s607, 4
          %s609 = sld [smem:[#allocation5 + %s608]]
          %p610 = scmp.gt.s32.totalorder %s609, 0
          %s611 = scalar_select %p610, %s609, 0
          %p612 = scmp.lt.s32.totalorder %s611, 2047
          %s613 = scalar_select %p612, %s611, 2047
          %s614 = scalar_lea.vmem [#allocation2], %s613
          %v615 = vld [vmem:[%s614] sm:$0x1]
          %s616 = sadd.s32 %s608, 1
          %s617 = sld [smem:[#allocation5 + %s616]]
          %p618 = scmp.gt.s32.totalorder %s617, 0
          %s619 = scalar_select %p618, %s617, 0
          %p620 = scmp.lt.s32.totalorder %s619, 2047
          %s621 = scalar_select %p620, %s619, 2047
          %s622 = scalar_lea.vmem [#allocation2], %s621
          %v623 = vld [vmem:[%s622] sm:$0x1]
          %v624 = vadd.f32 %v615, %v623
          %s625 = sadd.s32 %s608, 2
          %s626 = sld [smem:[#allocation5 + %s625]]
          %p627 = scmp.gt.s32.totalorder %s626, 0
          %s628 = scalar_select %p627, %s626, 0
          %p629 = scmp.lt.s32.totalorder %s628, 2047
          %s630 = scalar_select %p629, %s628, 2047
          %s631 = scalar_lea.vmem [#allocation2], %s630
          %v632 = vld [vmem:[%s631] sm:$0x1]
          %v633 = vadd.f32 %v624, %v632
          %s634 = sadd.s32 %s608, 3
          %s635 = sld [smem:[#allocation5 + %s634]]
          %p636 = scmp.gt.s32.totalorder %s635, 0
          %s637 = scalar_select %p636, %s635, 0
          %p638 = scmp.lt.s32.totalorder %s637, 2047
          %s639 = scalar_select %p638, %s637, 2047
          %s640 = scalar_lea.vmem [#allocation2], %s639
          %v641 = vld [vmem:[%s640] sm:$0x1]
          %v642 = vadd.f32 %v633, %v641
          %v643 = vpack.c.bf16 %v642, %v642
          %v645 = vunpack.c.l.b16 %v643
          %v646 = vpack.c.b16 %v645, %v645
          %v648 = vshll.u32 %v646, 16
          %v650 = vrot.slane %v648, 5
          %vm652 = vsmask.f32 7950
          %vm653 = vmand %vm601, %vm652
          %v654 = vld [vmem:[#allocation3] sm:$0x8]
          %v655 = vsel %vm653, %v650, %v654
          %656 = vst [vmem:[#allocation3] sm:$0x8] %v655
        $region40: #{tpu_custom_call.1} parent=27 // pred_fallthru
          _
        %v657 = vld [vmem:[#allocation3] sm:$0xf]
        %v658 = vld [vmem:[%s208] sm:$0xff]
        %v659 = vld [vmem:[%s208 + $0x8] sm:$0xff]
        %v660 = vld [vmem:[%s208 + $0x10] sm:$0xff]
        %v661 = vld [vmem:[%s208 + $0x18] sm:$0xff]
        %v662 = vld [vmem:[%s208 + $0x20] sm:$0xff]
        %v663 = vld [vmem:[%s208 + $0x28] sm:$0xff]
        %v664 = vld [vmem:[%s208 + $0x30] sm:$0xff]
        %v665 = vld [vmem:[%s208 + $0x38] sm:$0xff]
        %v666 = vld [vmem:[%s208 + $0x40] sm:$0xff]
        %v667 = vld [vmem:[%s208 + $0x48] sm:$0xff]
        %v668 = vld [vmem:[%s208 + $0x50] sm:$0xff]
        %v669 = vld [vmem:[%s208 + $0x58] sm:$0xff]
        %v670 = vld [vmem:[%s208 + $0x60] sm:$0xff]
        %v671 = vld [vmem:[%s208 + $0x68] sm:$0xff]
        %v672 = vld [vmem:[%s208 + $0x70] sm:$0xff]
        %v673 = vld [vmem:[%s208 + $0x78] sm:$0xff]
        %v674 = vld [vmem:[%s208 + $0x80] sm:$0xff]
        %v675 = vld [vmem:[%s208 + $0x88] sm:$0xff]
        %v676 = vld [vmem:[%s208 + $0x90] sm:$0xff]
        %v677 = vld [vmem:[%s208 + $0x98] sm:$0xff]
        %v678 = vld [vmem:[%s208 + $0xa0] sm:$0xff]
        %v679 = vld [vmem:[%s208 + $0xa8] sm:$0xff]
        %v680 = vld [vmem:[%s208 + $0xb0] sm:$0xff]
        %v681 = vld [vmem:[%s208 + $0xb8] sm:$0xff]
        %v682 = vld [vmem:[%s208 + $0xc0] sm:$0xff]
        %v683 = vld [vmem:[%s208 + $0xc8] sm:$0xff]
        %v684 = vld [vmem:[%s208 + $0xd0] sm:$0xff]
        %v685 = vld [vmem:[%s208 + $0xd8] sm:$0xff]
        %v686 = vld [vmem:[%s208 + $0xe0] sm:$0xff]
        %v687 = vld [vmem:[%s208 + $0xe8] sm:$0xff]
        %v688 = vld [vmem:[%s208 + $0xf0] sm:$0xff]
        %v689 = vld [vmem:[%s208 + $0xf8] sm:$0xff]
        %v690 = vld [vmem:[%s217] sm:$0xf]
        %v692 = vlaneseq
        %v693 = vshrl.u32 %v692, 7
        %v694 = vsub.s32 0, %v693
        %v695 = vrot.slane %v690, %v694
        %v696 = vlaneseq
        %v697 = vshrl.u32 %v696, 7
        %v698 = vsub.s32 1, %v697
        %v699 = vrot.slane %v690, %v698
        %v700 = vlaneseq
        %v701 = vshrl.u32 %v700, 7
        %v702 = vsub.s32 2, %v701
        %v703 = vrot.slane %v690, %v702
        %v704 = vlaneseq
        %v705 = vshrl.u32 %v704, 7
        %v706 = vsub.s32 3, %v705
        %v707 = vrot.slane %v690, %v706
        %v744 = vunpack.c.l.b16 %v658
        %v745 = vunpack.c.h.b16 %v658
        %v746 = vunpack.c.l.b16 %v659
        %v747 = vunpack.c.h.b16 %v659
        %v748 = vunpack.c.l.b16 %v660
        %v749 = vunpack.c.h.b16 %v660
        %v750 = vunpack.c.l.b16 %v661
        %v751 = vunpack.c.h.b16 %v661
        %v752 = vunpack.c.l.b16 %v662
        %v753 = vunpack.c.h.b16 %v662
        %v754 = vunpack.c.l.b16 %v663
        %v755 = vunpack.c.h.b16 %v663
        %v756 = vunpack.c.l.b16 %v664
        %v757 = vunpack.c.h.b16 %v664
        %v758 = vunpack.c.l.b16 %v665
        %v759 = vunpack.c.h.b16 %v665
        %v760 = vunpack.c.l.b16 %v666
        %v761 = vunpack.c.h.b16 %v666
        %v762 = vunpack.c.l.b16 %v667
        %v763 = vunpack.c.h.b16 %v667
        %v764 = vunpack.c.l.b16 %v668
        %v765 = vunpack.c.h.b16 %v668
        %v766 = vunpack.c.l.b16 %v669
        %v767 = vunpack.c.h.b16 %v669
        %v768 = vunpack.c.l.b16 %v670
        %v769 = vunpack.c.h.b16 %v670
        %v770 = vunpack.c.l.b16 %v671
        %v771 = vunpack.c.h.b16 %v671
        %v772 = vunpack.c.l.b16 %v672
        %v773 = vunpack.c.h.b16 %v672
        %v774 = vunpack.c.l.b16 %v673
        %v775 = vunpack.c.h.b16 %v673
        %v776 = vunpack.c.l.b16 %v674
        %v777 = vunpack.c.h.b16 %v674
        %v778 = vunpack.c.l.b16 %v675
        %v779 = vunpack.c.h.b16 %v675
        %v780 = vunpack.c.l.b16 %v676
        %v781 = vunpack.c.h.b16 %v676
        %v782 = vunpack.c.l.b16 %v677
        %v783 = vunpack.c.h.b16 %v677
        %v784 = vunpack.c.l.b16 %v678
        %v785 = vunpack.c.h.b16 %v678
        %v786 = vunpack.c.l.b16 %v679
        %v787 = vunpack.c.h.b16 %v679
        %v788 = vunpack.c.l.b16 %v680
        %v789 = vunpack.c.h.b16 %v680
        %v790 = vunpack.c.l.b16 %v681
        %v791 = vunpack.c.h.b16 %v681
        %v792 = vunpack.c.l.b16 %v682
        %v793 = vunpack.c.h.b16 %v682
        %v794 = vunpack.c.l.b16 %v683
        %v795 = vunpack.c.h.b16 %v683
        %v796 = vunpack.c.l.b16 %v684
        %v797 = vunpack.c.h.b16 %v684
        %v798 = vunpack.c.l.b16 %v685
        %v799 = vunpack.c.h.b16 %v685
        %v800 = vunpack.c.l.b16 %v686
        %v801 = vunpack.c.h.b16 %v686
        %v802 = vunpack.c.l.b16 %v687
        %v803 = vunpack.c.h.b16 %v687
        %v804 = vunpack.c.l.b16 %v688
        %v805 = vunpack.c.h.b16 %v688
        %v806 = vunpack.c.l.b16 %v689
        %v807 = vunpack.c.h.b16 %v689
        %v808 = vpack.c.b16 %v748, %v744
        %v809 = vpack.c.b16 %v749, %v745
        %v810 = vpack.c.b16 %v750, %v746
        %v811 = vpack.c.b16 %v751, %v747
        %v812 = vpack.c.b16 %v756, %v752
        %v813 = vpack.c.b16 %v757, %v753
        %v814 = vpack.c.b16 %v758, %v754
        %v815 = vpack.c.b16 %v759, %v755
        %v816 = vpack.c.b16 %v764, %v760
        %v817 = vpack.c.b16 %v765, %v761
        %v818 = vpack.c.b16 %v766, %v762
        %v819 = vpack.c.b16 %v767, %v763
        %v820 = vpack.c.b16 %v772, %v768
        %v821 = vpack.c.b16 %v773, %v769
        %v822 = vpack.c.b16 %v774, %v770
        %v823 = vpack.c.b16 %v775, %v771
        %v824 = vpack.c.b16 %v780, %v776
        %v825 = vpack.c.b16 %v781, %v777
        %v826 = vpack.c.b16 %v782, %v778
        %v827 = vpack.c.b16 %v783, %v779
        %v828 = vpack.c.b16 %v788, %v784
        %v829 = vpack.c.b16 %v789, %v785
        %v830 = vpack.c.b16 %v790, %v786
        %v831 = vpack.c.b16 %v791, %v787
        %v832 = vpack.c.b16 %v796, %v792
        %v833 = vpack.c.b16 %v797, %v793
        %v834 = vpack.c.b16 %v798, %v794
        %v835 = vpack.c.b16 %v799, %v795
        %v836 = vpack.c.b16 %v804, %v800
        %v837 = vpack.c.b16 %v805, %v801
        %v838 = vpack.c.b16 %v806, %v802
        %v839 = vpack.c.b16 %v807, %v803
        %872 = vmatprep.subr.bf16.mxu0 %v809
        %873 = vmatpush1.bf16.msra.mxu0 %v808
        %874 = vmatprep.subr.bf16.mxu0 %v813
        %875 = vmatpush1.bf16.msra.mxu0 %v812
        %876 = vmatprep.subr.bf16.mxu0 %v817
        %877 = vmatpush1.bf16.msra.mxu0 %v816
        %878 = vmatprep.subr.bf16.mxu0 %v821
        %879 = vmatpush1.bf16.msra.mxu0 %v820
        %880 = vmatprep.subr.bf16.mxu0 %v825
        %881 = vmatpush1.bf16.msra.mxu0 %v824
        %882 = vmatprep.subr.bf16.mxu0 %v829
        %883 = vmatpush1.bf16.msra.mxu0 %v828
        %884 = vmatprep.subr.bf16.mxu0 %v833
        %885 = vmatpush1.bf16.msra.mxu0 %v832
        %886 = vmatprep.subr.bf16.mxu0 %v837
        %887 = vmatpush1.bf16.msra.mxu0 %v836
        %888 = vmatprep.subr.bf16.mxu0 0
        %889 = vmatpush1.bf16.msra.mxu0 0
        %890 = vmatprep.subr.bf16.mxu0 0
        %891 = vmatpush1.bf16.msra.mxu0 0
        %892 = vmatprep.subr.bf16.mxu0 0
        %893 = vmatpush1.bf16.msra.mxu0 0
        %894 = vmatprep.subr.bf16.mxu0 0
        %895 = vmatpush1.bf16.msra.mxu0 0
        %896 = vmatprep.subr.bf16.mxu0 0
        %897 = vmatpush1.bf16.msra.mxu0 0
        %898 = vmatprep.subr.bf16.mxu0 0
        %899 = vmatpush1.bf16.msra.mxu0 0
        %900 = vmatprep.subr.bf16.mxu0 0
        %901 = vmatpush1.bf16.msra.mxu0 0
        %902 = vmatprep.subr.bf16.mxu0 0
        %903 = vmatpush1.bf16.msra.mxu0 0
        %904 = vmatprep.mubr.bf16.mxu0 0
        %905 = vmatmul.mubr.bf16.gmra.mrb[0].mxu0 %v657
        %v906 = vpop.f32.mrb[0].mxu0
        %v907 = vadd.f32 %v695, %v906
        %v908 = vpop.f32.mrb[0].mxu0
        %v909 = vadd.f32 %v699, %v908
        %v910 = vpop.f32.mrb[0].mxu0
        %v911 = vpop.f32.mrb[0].mxu0
        %912 = vdwg.mxu0
        %913 = vmatprep.subr.bf16.mxu0 %v811
        %914 = vmatpush1.bf16.msra.mxu0 %v810
        %915 = vmatprep.subr.bf16.mxu0 %v815
        %916 = vmatpush1.bf16.msra.mxu0 %v814
        %917 = vmatprep.subr.bf16.mxu0 %v819
        %918 = vmatpush1.bf16.msra.mxu0 %v818
        %919 = vmatprep.subr.bf16.mxu0 %v823
        %920 = vmatpush1.bf16.msra.mxu0 %v822
        %921 = vmatprep.subr.bf16.mxu0 %v827
        %922 = vmatpush1.bf16.msra.mxu0 %v826
        %923 = vmatprep.subr.bf16.mxu0 %v831
        %924 = vmatpush1.bf16.msra.mxu0 %v830
        %925 = vmatprep.subr.bf16.mxu0 %v835
        %926 = vmatpush1.bf16.msra.mxu0 %v834
        %927 = vmatprep.subr.bf16.mxu0 %v839
        %928 = vmatpush1.bf16.msra.mxu0 %v838
        %929 = vmatprep.subr.bf16.mxu0 0
        %930 = vmatpush1.bf16.msra.mxu0 0
        %931 = vmatprep.subr.bf16.mxu0 0
        %932 = vmatpush1.bf16.msra.mxu0 0
        %933 = vmatprep.subr.bf16.mxu0 0
        %934 = vmatpush1.bf16.msra.mxu0 0
        %935 = vmatprep.subr.bf16.mxu0 0
        %936 = vmatpush1.bf16.msra.mxu0 0
        %937 = vmatprep.subr.bf16.mxu0 0
        %938 = vmatpush1.bf16.msra.mxu0 0
        %939 = vmatprep.subr.bf16.mxu0 0
        %940 = vmatpush1.bf16.msra.mxu0 0
        %941 = vmatprep.subr.bf16.mxu0 0
        %942 = vmatpush1.bf16.msra.mxu0 0
        %943 = vmatprep.subr.bf16.mxu0 0
        %944 = vmatpush1.bf16.msra.mxu0 0
        %945 = vmatprep.mubr.bf16.mxu0 0
        %946 = vmatmul.mubr.bf16.gmra.mrb[0].mxu0 %v657
        %v947 = vpop.f32.mrb[0].mxu0
        %v948 = vadd.f32 %v703, %v947
        %v949 = vpop.f32.mrb[0].mxu0
        %v950 = vadd.f32 %v707, %v949
        %v951 = vpop.f32.mrb[0].mxu0
        %v952 = vpop.f32.mrb[0].mxu0
        %953 = vdwg.mxu0
        %954 = vst [vmem:[%s242] sm:$0xff] %v907
        %955 = vst [vmem:[%s242 + $0x8] sm:$0xff] %v909
        %956 = vst [vmem:[%s242 + $0x10] sm:$0xff] %v948
        %957 = vst [vmem:[%s242 + $0x18] sm:$0xff] %v950
        %s958 = sand.u32 %s121, 1
        %s959 = scalar_lea.sflag [#allocation8], %s958
        %s960 = sand.u32 %s121, 1
        %s961 = smul.addr %s960, 32
        %s962 = scalar_lea.vmem [#allocation11], %s961
        // Predicated region
        $region46: #{tpu_custom_call.1} parent=27 // pred_check
          %p963 = pneg %p131
        $region47: #{tpu_custom_call.1} parent=27 // pred_check_branch
          %965 = sbr.rel (%p963) target = $region49
        $region48: #{tpu_custom_call.1} parent=27 // pred_region
          %s966 = smul.u32 %s34, 2
          %s967 = sadd.s32 %s966, %s35
          %s968 = smul.u32 4, %s967
          %s970 = ssub.s32 512, 512
          %971 = vsyncadd %s959, %s970
          %s972 = smul.addr %s33, 16
          %s973 = sadd.s32 %s968, %s972
          %s974 = smul.addr %s973, 128
          %s975 = scalar_lea.hbm %s4, %s974
          %s977 = sshll.u32 %s962, 4
          %s978 = int_to_ptr.vmem [resolvable:$true] %s977
          %980 = dma.vmem_to_hbm [thread:$0]  %s978, 512, %s975, %s959
        $region49: #{tpu_custom_call.1} parent=27 // pred_fallthru
          _
      $region28: #{tpu_custom_call.1} parent=5 // pred_fallthru
        _
      %p981 = scmp.le.s32.totalorder 2, %s23
      // Predicated region
      $region50: #{tpu_custom_call.1} parent=5 // pred_check
        %p982 = pneg %p981
      $region51: #{tpu_custom_call.1} parent=5 // pred_check_branch
        %984 = sbr.rel (%p982) target = $region53
      $region52: #{tpu_custom_call.1} parent=5 // pred_region
        %s985 = ssub.s32 %s23, 2
        // Predicated region
        $region54: #{tpu_custom_call.1} parent=52 // pred_check
          %p986 = pneg %p137
        $region55: #{tpu_custom_call.1} parent=52 // pred_check_branch
          %988 = sbr.rel (%p986) target = $region57
        $region56: #{tpu_custom_call.1} parent=52 // pred_region
          %s989 = sand.u32 %s122, 1
          %s990 = scalar_lea.sflag [#allocation8], %s989
          %s991 = sand.u32 %s122, 1
          %s992 = smul.addr %s991, 32
          %s993 = scalar_lea.vmem [#allocation11], %s992
          %994 = dma.done %s990, 512
        $region57: #{tpu_custom_call.1} parent=52 // pred_fallthru
          _
      $region53: #{tpu_custom_call.1} parent=5 // pred_fallthru
        _
    $region6: #{tpu_custom_call.1} parent=1 // loop_footer
      %s27 = sadd.s32 1, %s23
    $region7: #{tpu_custom_call.1} parent=1 // loop_footer_branch
      %22 = sbr.rel target = $region3
    $region8: #{tpu_custom_call.1} parent=1 // loop_exit
      _
    %995 = vsyncpa [#allocation7], 1
    %s996 = scalar_lea.sflag [#allocation7], 1
    %997 = vsyncpa %s996, 1
    %998 = vsyncpa [#allocation10], 1
    %s999 = scalar_lea.sflag [#allocation10], 1
    %1000 = vsyncpa %s999, 1
    %1001 = vsyncpa [#allocation8], 1
    %s1002 = scalar_lea.sflag [#allocation8], 1
    %1003 = vsyncpa %s1002, 1

</llo_original>
